<compile_context>
chip_gen: v5e
topology: v5e:2x2
jax: 0.10.0
libtpu: 0.0.40
codegen_flags: <defaults>
</compile_context>

<pallas_src>
import functools

import jax
import jax.numpy as jnp
from jax.experimental import pallas as pl
from jax.experimental.pallas import tpu as pltpu


# -----------------------------------------------------------------------------
# Kernel
# -----------------------------------------------------------------------------
def _decoder_rnn_kernel(
    # scalar prefetch
    toks_ref,      # SMEM int32[T, B] token ids
    # inputs (VMEM, resident across the whole sequence)
    emb_ref,       # [V, H]    embedding table (f32)
    h0_ref,        # [BB, H]   initial hidden for this batch block (f32)
    w_rz_ref,      # [2H, 2H]  packed r|z weights (vstack of W_ih^T, W_hh^T cols 0:2H)
    w_n_ref,       # [2H, 2H]  block-diag n-gate weights ([W_in^T 0; 0 W_hn^T])
    b_ref,         # [2, 2H]   row 0 = b_ir+b_hr | b_iz+b_hz, row 1 = b_in | b_hn
    w_out_ref,     # [H, V]    out.weight^T
    b_out_ref,     # [1, V]
    # outputs
    logp_ref,      # [1, BB, V] per-step log-probs
    hout_ref,      # [BB, H]    final hidden
    # scratch
    h_scr,         # VMEM [BB, H] f32 — hidden carried across decode steps
    *,
    hidden_size: int,
    n_layers: int,
    batch_block: int,
):
    H = hidden_size
    BB = batch_block
    nb = pl.program_id(0)              # batch block ("parallel")
    t = pl.program_id(1)               # decode step ("arbitrary", carried)

    @pl.when(t == 0)
    def _init():
        h_scr[...] = h0_ref[...]

    # Gather this step's embedding rows from the VMEM-resident table.
    rows = []
    for b in range(BB):
        tok = toks_ref[t, nb * BB + b]
        rows.append(emb_ref[pl.ds(tok, 1), :])
    x = jnp.concatenate(rows, axis=0)                         # [BB, H] f32

    h = h_scr[...]                                            # [BB, H] f32
    b_rz = b_ref[0:1, :]                                      # [1, 2H]
    b_n = b_ref[1:2, :]                                       # [1, 2H]
    wdt = w_rz_ref.dtype                                      # bf16 or f32

    out = x
    # Faithful to the PyTorch module: the SAME single-layer GRU is applied
    # n_layers times (relu -> gru), carrying (output, hidden); seq len = 1.
    # TODO(synk): for n_layers > ~4 switch to lax.fori_loop over stacked
    # weights to keep vreg live ranges bounded.
    for _ in range(n_layers):
        xr = jnp.maximum(out, 0.0)                                      # F.relu
        xh = jnp.concatenate([xr, h], axis=1).astype(wdt)               # [BB, 2H]
        g_rz = jnp.dot(xh, w_rz_ref[...],
                       preferred_element_type=jnp.float32) + b_rz       # [BB, 2H]
        r = jax.nn.sigmoid(g_rz[:, 0:H])
        z = jax.nn.sigmoid(g_rz[:, H:2 * H])
        g_n = jnp.dot(xh, w_n_ref[...],
                      preferred_element_type=jnp.float32) + b_n         # [BB, 2H]
        n = jnp.tanh(g_n[:, 0:H] + r * g_n[:, H:2 * H])
        h = (1.0 - z) * n + z * h
        out = h

    h_scr[...] = h                                            # carry to t+1

    # out = Linear(H, V); log_softmax over the vocab dim (lane-dense V).
    logits = (jnp.dot(out.astype(wdt), w_out_ref[...],
                      preferred_element_type=jnp.float32) + b_out_ref[...])
    m = jnp.max(logits, axis=-1, keepdims=True)
    lse = jnp.log(jnp.sum(jnp.exp(logits - m), axis=-1, keepdims=True)) + m
    logp_ref[0] = logits - lse

    @pl.when(t == pl.num_programs(1) - 1)
    def _finalize():
        hout_ref[...] = h


# -----------------------------------------------------------------------------
# One-time parameter re-layout (hoisted out of the decode path)
# -----------------------------------------------------------------------------
def prepare_params(params, weight_dtype=jnp.bfloat16):
    """Pack / transpose PyTorch-layout params once; reuse across decode calls."""
    emb = params["embedding"]                        # [V, H] f32
    V, H = emb.shape
    w_ih_t = params["gru_w_ih"].T                    # [H, 3H] gates r|z|n on lanes
    w_hh_t = params["gru_w_hh"].T                    # [H, 3H]
    b_ih, b_hh = params["gru_b_ih"], params["gru_b_hh"]

    # r|z gates: one K=2H matmul of [relu(x) | h] against stacked weights.
    w_rz = jnp.concatenate([w_ih_t[:, :2 * H], w_hh_t[:, :2 * H]], axis=0)  # [2H, 2H]
    # n gate: block-diagonal so gi_n and gh_n come out side by side.
    w_n = jnp.zeros((2 * H, 2 * H), jnp.float32)
    w_n = w_n.at[:H, :H].set(w_ih_t[:, 2 * H:])
    w_n = w_n.at[H:, H:].set(w_hh_t[:, 2 * H:])

    b_rz = (b_ih[:2 * H] + b_hh[:2 * H]).reshape(1, 2 * H)
    b_n = jnp.concatenate([b_ih[2 * H:], b_hh[2 * H:]]).reshape(1, 2 * H)

    return {
        # Embedding kept f32 here (V*H*4 = 128 KB, trivially VMEM-resident).
        # TODO(synk): at realistic vocab sizes (table not resident) switch back
        # to a data-dependent row-gather BlockSpec and store the table in bf16.
        "emb": emb,
        "w_rz": w_rz.astype(weight_dtype),
        "w_n": w_n.astype(weight_dtype),
        "b_gates": jnp.concatenate([b_rz, b_n], axis=0),       # [2, 2H] f32
        "w_out": params["out_w"].T.astype(weight_dtype),       # [H, V]
        "b_out": params["out_b"].reshape(1, V),                # [1, V] f32
    }


# -----------------------------------------------------------------------------
# VMEM budget accounting (replaces the hard-coded 16 MiB limit)
# -----------------------------------------------------------------------------
def _vmem_limit_bytes(resident_arrays, batch_block, V, H):
    def nbytes(a):
        return int(a.size) * a.dtype.itemsize
    resident = sum(nbytes(a) for a in resident_arrays)
    # Conservative: 2x for double-buffering of every input block, plus the two
    # output blocks (logp tile + final hidden) and the hidden scratch.
    out_blocks = 2 * (batch_block * V * 4) + 2 * (batch_block * H * 4)
    scratch = batch_block * H * 4
    total = 2 * resident + out_blocks + scratch
    budget = int(1.5 * total) + (4 << 20)                      # headroom
    try:
        cap = pltpu.get_tpu_info().vmem_capacity_bytes - (8 << 20)
    except Exception:
        cap = (64 << 20) - (8 << 20)                           # v7x floor
    return max(16 << 20, min(budget, cap))


# -----------------------------------------------------------------------------
# Full-sequence decode (one pallas_call for all T steps, B streams)
# -----------------------------------------------------------------------------
@functools.partial(jax.jit, static_argnames=("n_layers", "batch_block"))
def decoder_rnn_decode(tokens, hidden, prepped, *, n_layers=1, batch_block=8):
    """tokens: int32[T, B]; hidden: f32[1, B, H].
    Returns (log_probs f32[T, B, V], hidden f32[1, B, H])."""
    T, B = tokens.shape
    V, H = prepped["emb"].shape
    assert B % batch_block == 0
    NB = B // batch_block

    tokens = jnp.clip(tokens.astype(jnp.int32), 0, V - 1)     # OOB-id guard
    h0 = hidden.reshape(B, H).astype(jnp.float32)

    const = lambda shape: pl.BlockSpec(shape, lambda nb, t, toks: (0, 0))
    in_specs = [
        const((V, H)),                                                 # emb
        pl.BlockSpec((batch_block, H), lambda nb, t, toks: (nb, 0)),   # h0
        const((2 * H, 2 * H)),                                         # w_rz
        const((2 * H, 2 * H)),                                         # w_n
        const((2, 2 * H)),                                             # gate biases
        const((H, V)),                                                 # w_out
        const((1, V)),                                                 # b_out
    ]
    out_specs = [
        pl.BlockSpec((1, batch_block, V), lambda nb, t, toks: (t, nb, 0)),
        pl.BlockSpec((batch_block, H), lambda nb, t, toks: (nb, 0)),
    ]

    vmem_bytes = _vmem_limit_bytes(list(prepped.values()) + [h0],
                                   batch_block, V, H)

    logp, h_final = pl.pallas_call(
        functools.partial(_decoder_rnn_kernel, hidden_size=H,
                          n_layers=n_layers, batch_block=batch_block),
        out_shape=(
            jax.ShapeDtypeStruct((T, B, V), jnp.float32),
            jax.ShapeDtypeStruct((B, H), jnp.float32),
        ),
        grid_spec=pltpu.PrefetchScalarGridSpec(
            num_scalar_prefetch=1,
            grid=(NB, T),
            in_specs=in_specs,
            out_specs=out_specs,
            scratch_shapes=[pltpu.VMEM((batch_block, H), jnp.float32)],
        ),
        compiler_params=pltpu.CompilerParams(
            dimension_semantics=("parallel", "arbitrary"),
            vmem_limit_bytes=vmem_bytes,
        ),
    )(tokens, prepped["emb"], h0, prepped["w_rz"], prepped["w_n"],
      prepped["b_gates"], prepped["w_out"], prepped["b_out"])

    return logp, h_final.reshape(1, B, H)


# -----------------------------------------------------------------------------
# Pure-JAX reference (module semantics, applied step by step per stream)
# -----------------------------------------------------------------------------
def decoder_rnn_reference(tokens, hidden, params, *, n_layers=1,
                          weight_dtype=jnp.float32):
    """Weights the kernel stores in `weight_dtype` are rounded identically."""
    with jax.default_matmul_precision("highest"):
        q = lambda w: w.astype(weight_dtype).astype(jnp.float32)
        emb = params["embedding"]                    # kernel keeps emb in f32
        w_ih, w_hh = q(params["gru_w_ih"]), q(params["gru_w_hh"])
        b_ih, b_hh = params["gru_b_ih"], params["gru_b_hh"]
        w_out, b_out = q(params["out_w"]), params["out_b"]
        H = emb.shape[1]
        T, B = tokens.shape
        h = hidden.reshape(B, H)
        logps = []
        for t in range(T):
            out = emb[tokens[t]]                     # [B, H]
            for _ in range(n_layers):
                xr = jnp.maximum(out, 0.0)
                gi = xr @ w_ih.T + b_ih
                gh = h @ w_hh.T + b_hh
                r = jax.nn.sigmoid(gi[:, :H] + gh[:, :H])
                z = jax.nn.sigmoid(gi[:, H:2 * H] + gh[:, H:2 * H])
                n = jnp.tanh(gi[:, 2 * H:] + r * gh[:, 2 * H:])
                h = (1.0 - z) * n + z * h
                out = h
            logits = out @ w_out.T + b_out
            logps.append(jax.nn.log_softmax(logits, axis=-1))
        return jnp.stack(logps, axis=0), h.reshape(1, B, H)


# -----------------------------------------------------------------------------
# Main
# -----------------------------------------------------------------------------
if __name__ == "__main__":
    HIDDEN = 128      # hidden_size  (lane-dense: multiple of 128)
    VOCAB = 256       # output_size  (lane-dense: multiple of 128)
    N_LAYERS = 1
    BATCH = 8         # decode streams (fills vreg sublanes / MXU M rows)
    STEPS = 6         # decode steps run inside one pallas_call

    key = jax.random.PRNGKey(0)
    ks = jax.random.split(key, 9)
    scale = 0.1
    params = {
        "embedding": scale * jax.random.normal(ks[0], (VOCAB, HIDDEN), jnp.float32),
        "gru_w_ih": scale * jax.random.normal(ks[1], (3 * HIDDEN, HIDDEN), jnp.float32),
        "gru_w_hh": scale * jax.random.normal(ks[2], (3 * HIDDEN, HIDDEN), jnp.float32),
        "gru_b_ih": scale * jax.random.normal(ks[3], (3 * HIDDEN,), jnp.float32),
        "gru_b_hh": scale * jax.random.normal(ks[4], (3 * HIDDEN,), jnp.float32),
        "out_w": scale * jax.random.normal(ks[5], (VOCAB, HIDDEN), jnp.float32),
        "out_b": scale * jax.random.normal(ks[6], (VOCAB,), jnp.float32),
    }
    tokens = jax.random.randint(ks[7], (STEPS, BATCH), 0, VOCAB, jnp.int32)
    hidden0 = 0.1 * jax.random.normal(ks[8], (1, BATCH, HIDDEN), jnp.float32)

    # Check both weight dtypes: f32 (tight tolerance) and bf16 (loosened, per
    # review) against a reference using identically-rounded weights.
    for wdt, tol in ((jnp.float32, 2e-4), (jnp.bfloat16, 2e-2)):
        prepped = prepare_params(params, weight_dtype=wdt)
        prepped = jax.tree_util.tree_map(jax.block_until_ready, prepped)

        logp, h_new = decoder_rnn_decode(tokens, hidden0, prepped,
                                         n_layers=N_LAYERS, batch_block=BATCH)
        jax.block_until_ready((logp, h_new))

        ref_logp, ref_h = decoder_rnn_reference(tokens, hidden0, params,
                                                n_layers=N_LAYERS,
                                                weight_dtype=wdt)
        assert logp.shape == (STEPS, BATCH, VOCAB)
        assert h_new.shape == (1, BATCH, HIDDEN)
        assert jnp.allclose(logp, ref_logp, atol=tol, rtol=tol), str(wdt)
        assert jnp.allclose(h_new, ref_h, atol=tol, rtol=tol), str(wdt)

    print("KERNEL_OK")
</pallas_src>

<mosaic_0001>
module attributes {stable_mosaic.version = 11 : i64} {
  func.func @_decoder_rnn_kernel(%arg0: i32, %arg1: i32, %arg2: memref<6x8xi32, #tpu.memory_space<smem>>, %arg3: memref<256x128xf32, #tpu.memory_space<vmem>>, %arg4: memref<8x128xf32, #tpu.memory_space<vmem>>, %arg5: memref<256x256xf32, #tpu.memory_space<vmem>>, %arg6: memref<256x256xf32, #tpu.memory_space<vmem>>, %arg7: memref<2x256xf32, #tpu.memory_space<vmem>>, %arg8: memref<128x256xf32, #tpu.memory_space<vmem>>, %arg9: memref<1x256xf32, #tpu.memory_space<vmem>>, %arg10: memref<1x8x256xf32, #tpu.memory_space<vmem>>, %arg11: memref<8x128xf32, #tpu.memory_space<vmem>>, %arg12: memref<8x128xf32, #tpu.memory_space<vmem>>) attributes {dimension_semantics = [#tpu.dimension_semantics<parallel>, #tpu.dimension_semantics<arbitrary>], iteration_bounds = array<i64: 1, 6>, scalar_prefetch = 1 : i64, scratch_operands = 1 : i64, tpu.core_type = #tpu.core_type<tc>, window_params = [{pipeline_mode = #tpu.pipeline_mode<synchronous>, transform_indices = @transform_0, window_bounds = array<i64: 256, 128>}, {transform_indices = @transform_1, window_bounds = array<i64: 8, 128>}, {pipeline_mode = #tpu.pipeline_mode<synchronous>, transform_indices = @transform_2, window_bounds = array<i64: 256, 256>}, {pipeline_mode = #tpu.pipeline_mode<synchronous>, transform_indices = @transform_3, window_bounds = array<i64: 256, 256>}, {pipeline_mode = #tpu.pipeline_mode<synchronous>, transform_indices = @transform_4, window_bounds = array<i64: 2, 256>}, {pipeline_mode = #tpu.pipeline_mode<synchronous>, transform_indices = @transform_5, window_bounds = array<i64: 128, 256>}, {pipeline_mode = #tpu.pipeline_mode<synchronous>, transform_indices = @transform_6, window_bounds = array<i64: 1, 256>}, {transform_indices = @transform_7, window_bounds = array<i64: 1, 8, 256>}, {transform_indices = @transform_8, window_bounds = array<i64: 8, 128>}]} {
    %c0_i32 = arith.constant 0 : i32
    %0 = arith.cmpi eq, %arg1, %c0_i32 : i32
    %1 = arith.extui %0 : i1 to i32
    %c0_i32_0 = arith.constant 0 : i32
    %2 = arith.cmpi ne, %1, %c0_i32_0 : i32
    scf.if %2 {
      %c0_44 = arith.constant 0 : index
      %c0_45 = arith.constant 0 : index
      %119 = vector.load %arg4[%c0_44, %c0_45] : memref<8x128xf32, #tpu.memory_space<vmem>>, vector<8x128xf32>
      %c0_46 = arith.constant 0 : index
      %c0_47 = arith.constant 0 : index
      %120 = vector.load %arg12[%c0_46, %c0_47] : memref<8x128xf32, #tpu.memory_space<vmem>>, vector<8x128xf32>
      tpu.vector_store %arg12[%c0_46, %c0_47], %119 {strides = array<i32>} : memref<8x128xf32, #tpu.memory_space<vmem>>, vector<8x128xf32>,
    } else {
    }
    %c8_i32 = arith.constant 8 : i32
    %3 = arith.muli %arg0, %c8_i32 : i32
    %c0_i32_1 = arith.constant 0 : i32
    %4 = arith.addi %3, %c0_i32_1 : i32
    %5 = arith.index_cast %arg1 : i32 to index
    %6 = arith.index_cast %4 : i32 to index
    %7 = memref.load %arg2[%5, %6] : memref<6x8xi32, #tpu.memory_space<smem>>
    %8 = arith.index_cast %7 : i32 to index
    %c0 = arith.constant 0 : index
    %9 = vector.load %arg3[%8, %c0] : memref<256x128xf32, #tpu.memory_space<vmem>>, vector<1x128xf32>
    %c8_i32_2 = arith.constant 8 : i32
    %10 = arith.muli %arg0, %c8_i32_2 : i32
    %c1_i32 = arith.constant 1 : i32
    %11 = arith.addi %10, %c1_i32 : i32
    %12 = arith.index_cast %arg1 : i32 to index
    %13 = arith.index_cast %11 : i32 to index
    %14 = memref.load %arg2[%12, %13] : memref<6x8xi32, #tpu.memory_space<smem>>
    %15 = arith.index_cast %14 : i32 to index
    %c0_3 = arith.constant 0 : index
    %16 = vector.load %arg3[%15, %c0_3] : memref<256x128xf32, #tpu.memory_space<vmem>>, vector<1x128xf32>
    %c8_i32_4 = arith.constant 8 : i32
    %17 = arith.muli %arg0, %c8_i32_4 : i32
    %c2_i32 = arith.constant 2 : i32
    %18 = arith.addi %17, %c2_i32 : i32
    %19 = arith.index_cast %arg1 : i32 to index
    %20 = arith.index_cast %18 : i32 to index
    %21 = memref.load %arg2[%19, %20] : memref<6x8xi32, #tpu.memory_space<smem>>
    %22 = arith.index_cast %21 : i32 to index
    %c0_5 = arith.constant 0 : index
    %23 = vector.load %arg3[%22, %c0_5] : memref<256x128xf32, #tpu.memory_space<vmem>>, vector<1x128xf32>
    %c8_i32_6 = arith.constant 8 : i32
    %24 = arith.muli %arg0, %c8_i32_6 : i32
    %c3_i32 = arith.constant 3 : i32
    %25 = arith.addi %24, %c3_i32 : i32
    %26 = arith.index_cast %arg1 : i32 to index
    %27 = arith.index_cast %25 : i32 to index
    %28 = memref.load %arg2[%26, %27] : memref<6x8xi32, #tpu.memory_space<smem>>
    %29 = arith.index_cast %28 : i32 to index
    %c0_7 = arith.constant 0 : index
    %30 = vector.load %arg3[%29, %c0_7] : memref<256x128xf32, #tpu.memory_space<vmem>>, vector<1x128xf32>
    %c8_i32_8 = arith.constant 8 : i32
    %31 = arith.muli %arg0, %c8_i32_8 : i32
    %c4_i32 = arith.constant 4 : i32
    %32 = arith.addi %31, %c4_i32 : i32
    %33 = arith.index_cast %arg1 : i32 to index
    %34 = arith.index_cast %32 : i32 to index
    %35 = memref.load %arg2[%33, %34] : memref<6x8xi32, #tpu.memory_space<smem>>
    %36 = arith.index_cast %35 : i32 to index
    %c0_9 = arith.constant 0 : index
    %37 = vector.load %arg3[%36, %c0_9] : memref<256x128xf32, #tpu.memory_space<vmem>>, vector<1x128xf32>
    %c8_i32_10 = arith.constant 8 : i32
    %38 = arith.muli %arg0, %c8_i32_10 : i32
    %c5_i32 = arith.constant 5 : i32
    %39 = arith.addi %38, %c5_i32 : i32
    %40 = arith.index_cast %arg1 : i32 to index
    %41 = arith.index_cast %39 : i32 to index
    %42 = memref.load %arg2[%40, %41] : memref<6x8xi32, #tpu.memory_space<smem>>
    %43 = arith.index_cast %42 : i32 to index
    %c0_11 = arith.constant 0 : index
    %44 = vector.load %arg3[%43, %c0_11] : memref<256x128xf32, #tpu.memory_space<vmem>>, vector<1x128xf32>
    %c8_i32_12 = arith.constant 8 : i32
    %45 = arith.muli %arg0, %c8_i32_12 : i32
    %c6_i32 = arith.constant 6 : i32
    %46 = arith.addi %45, %c6_i32 : i32
    %47 = arith.index_cast %arg1 : i32 to index
    %48 = arith.index_cast %46 : i32 to index
    %49 = memref.load %arg2[%47, %48] : memref<6x8xi32, #tpu.memory_space<smem>>
    %50 = arith.index_cast %49 : i32 to index
    %c0_13 = arith.constant 0 : index
    %51 = vector.load %arg3[%50, %c0_13] : memref<256x128xf32, #tpu.memory_space<vmem>>, vector<1x128xf32>
    %c8_i32_14 = arith.constant 8 : i32
    %52 = arith.muli %arg0, %c8_i32_14 : i32
    %c7_i32 = arith.constant 7 : i32
    %53 = arith.addi %52, %c7_i32 : i32
    %54 = arith.index_cast %arg1 : i32 to index
    %55 = arith.index_cast %53 : i32 to index
    %56 = memref.load %arg2[%54, %55] : memref<6x8xi32, #tpu.memory_space<smem>>
    %57 = arith.index_cast %56 : i32 to index
    %c0_15 = arith.constant 0 : index
    %58 = vector.load %arg3[%57, %c0_15] : memref<256x128xf32, #tpu.memory_space<vmem>>, vector<1x128xf32>
    %59 = tpu.concatenate %9, %16, %23, %30, %37, %44, %51, %58 in 0 : vector<1x128xf32>, vector<1x128xf32>, vector<1x128xf32>, vector<1x128xf32>, vector<1x128xf32>, vector<1x128xf32>, vector<1x128xf32>, vector<1x128xf32> -> vector<8x128xf32>
    %c0_16 = arith.constant 0 : index
    %c0_17 = arith.constant 0 : index
    %60 = vector.load %arg12[%c0_16, %c0_17] : memref<8x128xf32, #tpu.memory_space<vmem>>, vector<8x128xf32>
    %c0_18 = arith.constant 0 : index
    %c0_19 = arith.constant 0 : index
    %61 = vector.load %arg7[%c0_18, %c0_19] : memref<2x256xf32, #tpu.memory_space<vmem>>, vector<1x256xf32>
    %c1 = arith.constant 1 : index
    %c0_20 = arith.constant 0 : index
    %62 = vector.load %arg7[%c1, %c0_20] : memref<2x256xf32, #tpu.memory_space<vmem>>, vector<1x256xf32>
    %cst = arith.constant 0.000000e+00 : f32
    %63 = vector.broadcast %cst : f32 to vector<8x128xf32>
    %64 = arith.maximumf %59, %63 : vector<8x128xf32>
    %65 = tpu.concatenate %64, %60 in 1 : vector<8x128xf32>, vector<8x128xf32> -> vector<8x256xf32>
    %c0_21 = arith.constant 0 : index
    %c0_22 = arith.constant 0 : index
    %66 = vector.load %arg5[%c0_21, %c0_22] : memref<256x256xf32, #tpu.memory_space<vmem>>, vector<256x256xf32>
    %cst_23 = arith.constant dense<0.000000e+00> : vector<8x256xf32>
    %67 = tpu.matmul %65, %66, %cst_23 {dimension_numbers = #tpu.dot_dimension_numbers<[1], [0], [0], [1], [0, 0, 1, 1], [], []>} : vector<8x256xf32>, vector<256x256xf32>, vector<8x256xf32> -> vector<8x256xf32>
    %68 = vector.broadcast %61 : vector<1x256xf32> to vector<8x256xf32>
    %69 = arith.addf %67, %68 : vector<8x256xf32>
    %70 = vector.extract_strided_slice %69 {offsets = [0, 0], sizes = [8, 128], strides = [1, 1]} : vector<8x256xf32> to vector<8x128xf32>
    %71 = arith.negf %70 : vector<8x128xf32>
    %72 = math.exp %71 : vector<8x128xf32>
    %cst_24 = arith.constant 1.000000e+00 : f32
    %73 = vector.broadcast %cst_24 : f32 to vector<8x128xf32>
    %74 = arith.addf %73, %72 : vector<8x128xf32>
    %75 = arith.divf %73, %74 : vector<8x128xf32>
    %76 = vector.extract_strided_slice %69 {offsets = [0, 128], sizes = [8, 128], strides = [1, 1]} : vector<8x256xf32> to vector<8x128xf32>
    %77 = arith.negf %76 : vector<8x128xf32>
    %78 = math.exp %77 : vector<8x128xf32>
    %cst_25 = arith.constant 1.000000e+00 : f32
    %79 = vector.broadcast %cst_25 : f32 to vector<8x128xf32>
    %80 = arith.addf %79, %78 : vector<8x128xf32>
    %81 = arith.divf %79, %80 : vector<8x128xf32>
    %c0_26 = arith.constant 0 : index
    %c0_27 = arith.constant 0 : index
    %82 = vector.load %arg6[%c0_26, %c0_27] : memref<256x256xf32, #tpu.memory_space<vmem>>, vector<256x256xf32>
    %cst_28 = arith.constant dense<0.000000e+00> : vector<8x256xf32>
    %83 = tpu.matmul %65, %82, %cst_28 {dimension_numbers = #tpu.dot_dimension_numbers<[1], [0], [0], [1], [0, 0, 1, 1], [], []>} : vector<8x256xf32>, vector<256x256xf32>, vector<8x256xf32> -> vector<8x256xf32>
    %84 = vector.broadcast %62 : vector<1x256xf32> to vector<8x256xf32>
    %85 = arith.addf %83, %84 : vector<8x256xf32>
    %86 = vector.extract_strided_slice %85 {offsets = [0, 0], sizes = [8, 128], strides = [1, 1]} : vector<8x256xf32> to vector<8x128xf32>
    %87 = vector.extract_strided_slice %85 {offsets = [0, 128], sizes = [8, 128], strides = [1, 1]} : vector<8x256xf32> to vector<8x128xf32>
    %88 = arith.mulf %75, %87 : vector<8x128xf32>
    %89 = arith.addf %86, %88 : vector<8x128xf32>
    %90 = math.tanh %89 : vector<8x128xf32>
    %cst_29 = arith.constant 1.000000e+00 : f32
    %91 = vector.broadcast %cst_29 : f32 to vector<8x128xf32>
    %92 = arith.subf %91, %81 : vector<8x128xf32>
    %93 = arith.mulf %92, %90 : vector<8x128xf32>
    %94 = arith.mulf %81, %60 : vector<8x128xf32>
    %95 = arith.addf %93, %94 : vector<8x128xf32>
    %c0_30 = arith.constant 0 : index
    %c0_31 = arith.constant 0 : index
    %96 = vector.load %arg12[%c0_30, %c0_31] : memref<8x128xf32, #tpu.memory_space<vmem>>, vector<8x128xf32>
    tpu.vector_store %arg12[%c0_30, %c0_31], %95 {strides = array<i32>} : memref<8x128xf32, #tpu.memory_space<vmem>>, vector<8x128xf32>,
    %c0_32 = arith.constant 0 : index
    %c0_33 = arith.constant 0 : index
    %97 = vector.load %arg8[%c0_32, %c0_33] : memref<128x256xf32, #tpu.memory_space<vmem>>, vector<128x256xf32>
    %cst_34 = arith.constant dense<0.000000e+00> : vector<8x256xf32>
    %98 = tpu.matmul %95, %97, %cst_34 {dimension_numbers = #tpu.dot_dimension_numbers<[1], [0], [0], [1], [0, 0, 1, 1], [], []>} : vector<8x128xf32>, vector<128x256xf32>, vector<8x256xf32> -> vector<8x256xf32>
    %c0_35 = arith.constant 0 : index
    %c0_36 = arith.constant 0 : index
    %99 = vector.load %arg9[%c0_35, %c0_36] : memref<1x256xf32, #tpu.memory_space<vmem>>, vector<1x256xf32>
    %100 = vector.broadcast %99 : vector<1x256xf32> to vector<8x256xf32>
    %101 = arith.addf %98, %100 : vector<8x256xf32>
    %cst_37 = arith.constant dense<0xFF800000> : vector<8xf32>
    %102 = vector.multi_reduction <maximumf>, %101, %cst_37 [1] : vector<8x256xf32> to vector<8xf32>
    %103 = vector.shape_cast %102 : vector<8xf32> to vector<8x1xf32>
    %104 = vector.broadcast %103 : vector<8x1xf32> to vector<8x256xf32>
    %105 = arith.subf %101, %104 : vector<8x256xf32>
    %106 = math.exp %105 : vector<8x256xf32>
    %cst_38 = arith.constant dense<0.000000e+00> : vector<8xf32>
    %107 = vector.multi_reduction <add>, %106, %cst_38 [1] : vector<8x256xf32> to vector<8xf32>
    %108 = vector.shape_cast %107 : vector<8xf32> to vector<8x1xf32>
    %109 = math.log %108 : vector<8x1xf32>
    %110 = arith.addf %109, %103 : vector<8x1xf32>
    %111 = vector.broadcast %110 : vector<8x1xf32> to vector<8x256xf32>
    %112 = arith.subf %101, %111 : vector<8x256xf32>
    %c0_39 = arith.constant 0 : index
    %c0_40 = arith.constant 0 : index
    %c0_41 = arith.constant 0 : index
    %113 = vector.load %arg10[%c0_39, %c0_40, %c0_41] : memref<1x8x256xf32, #tpu.memory_space<vmem>>, vector<1x8x256xf32>
    %114 = vector.shape_cast %113 : vector<1x8x256xf32> to vector<8x256xf32>
    %115 = vector.shape_cast %112 : vector<8x256xf32> to vector<1x8x256xf32>
    tpu.vector_store %arg10[%c0_39, %c0_40, %c0_41], %115 {strides = array<i32>} : memref<1x8x256xf32, #tpu.memory_space<vmem>>, vector<1x8x256xf32>,
    %c5_i32_42 = arith.constant 5 : i32
    %116 = arith.cmpi eq, %arg1, %c5_i32_42 : i32
    %117 = arith.extui %116 : i1 to i32
    %c0_i32_43 = arith.constant 0 : i32
    %118 = arith.cmpi ne, %117, %c0_i32_43 : i32
    scf.if %118 {
      %c0_44 = arith.constant 0 : index
      %c0_45 = arith.constant 0 : index
      %119 = vector.load %arg11[%c0_44, %c0_45] : memref<8x128xf32, #tpu.memory_space<vmem>>, vector<8x128xf32>
      tpu.vector_store %arg11[%c0_44, %c0_45], %95 {strides = array<i32>} : memref<8x128xf32, #tpu.memory_space<vmem>>, vector<8x128xf32>,
    } else {
    }
    return
  }
  func.func @transform_0(%arg0: i32, %arg1: i32, %arg2: memref<6x8xi32, #tpu.memory_space<smem>>) -> (i32, i32) {
    %c0_i32 = arith.constant 0 : i32
    %c0_i32_0 = arith.constant 0 : i32
    %c0_i32_1 = arith.constant 0 : i32
    return %c0_i32, %c0_i32_0 : i32, i32
  }
  func.func @transform_1(%arg0: i32, %arg1: i32, %arg2: memref<6x8xi32, #tpu.memory_space<smem>>) -> (i32, i32) {
    %c0_i32 = arith.constant 0 : i32
    %c0_i32_0 = arith.constant 0 : i32
    return %arg0, %c0_i32 : i32, i32
  }
  func.func @transform_2(%arg0: i32, %arg1: i32, %arg2: memref<6x8xi32, #tpu.memory_space<smem>>) -> (i32, i32) {
    %c0_i32 = arith.constant 0 : i32
    %c0_i32_0 = arith.constant 0 : i32
    %c0_i32_1 = arith.constant 0 : i32
    return %c0_i32, %c0_i32_0 : i32, i32
  }
  func.func @transform_3(%arg0: i32, %arg1: i32, %arg2: memref<6x8xi32, #tpu.memory_space<smem>>) -> (i32, i32) {
    %c0_i32 = arith.constant 0 : i32
    %c0_i32_0 = arith.constant 0 : i32
    %c0_i32_1 = arith.constant 0 : i32
    return %c0_i32, %c0_i32_0 : i32, i32
  }
  func.func @transform_4(%arg0: i32, %arg1: i32, %arg2: memref<6x8xi32, #tpu.memory_space<smem>>) -> (i32, i32) {
    %c0_i32 = arith.constant 0 : i32
    %c0_i32_0 = arith.constant 0 : i32
    %c0_i32_1 = arith.constant 0 : i32
    return %c0_i32, %c0_i32_0 : i32, i32
  }
  func.func @transform_5(%arg0: i32, %arg1: i32, %arg2: memref<6x8xi32, #tpu.memory_space<smem>>) -> (i32, i32) {
    %c0_i32 = arith.constant 0 : i32
    %c0_i32_0 = arith.constant 0 : i32
    %c0_i32_1 = arith.constant 0 : i32
    return %c0_i32, %c0_i32_0 : i32, i32
  }
  func.func @transform_6(%arg0: i32, %arg1: i32, %arg2: memref<6x8xi32, #tpu.memory_space<smem>>) -> (i32, i32) {
    %c0_i32 = arith.constant 0 : i32
    %c0_i32_0 = arith.constant 0 : i32
    %c0_i32_1 = arith.constant 0 : i32
    return %c0_i32, %c0_i32_0 : i32, i32
  }
  func.func @transform_7(%arg0: i32, %arg1: i32, %arg2: memref<6x8xi32, #tpu.memory_space<smem>>) -> (i32, i32, i32) {
    %c0_i32 = arith.constant 0 : i32
    %c0_i32_0 = arith.constant 0 : i32
    return %arg1, %arg0, %c0_i32 : i32, i32, i32
  }
  func.func @transform_8(%arg0: i32, %arg1: i32, %arg2: memref<6x8xi32, #tpu.memory_space<smem>>) -> (i32, i32) {
    %c0_i32 = arith.constant 0 : i32
    %c0_i32_0 = arith.constant 0 : i32
    return %arg0, %c0_i32 : i32, i32
  }
}

</mosaic_0001>

<llo_original>
// kernel: decoder_rnn_decode.1
$region0: #{decoder_rnn_decode.1}
  #allocation0 [shape = 'u32[]', space=smem, size = 0x4, offset = 0x4, fixed_abs, tag = 'smem constant byte address 0x4 - core index']
  #allocation1 [shape = 'u32[72,128]{1,0:T(1,128)}', space=vmem, size = 0x9000, scoped, tag = 'internal scratch']
  #allocation2 [shape = 'f32[8,128]{1,0:T(8,128)}', space=vmem, size = 0x1000, scoped, tag = 'scratch operand']
  #allocation3 [shape = 's32[1]{0}', space=sflag, size = 0x4, scoped, tag = 'scoped memory for decoder_rnn_decode.1']
  #allocation4 [shape = 'u8[4096]{0}', space=smem, size = 0x1000, scoped, tag = 'prefetched SMEM operand 0']
  %s0 = inlined_call_operand.vmem [shape: s32[6,8], index: 0, kind: input, shape index: {}]
  %s1 = inlined_call_operand.hbm [shape: f32[256,128], index: 1, kind: input, shape index: {}]
  %s2 = inlined_call_operand.vmem [shape: f32[8,128], index: 2, kind: input, shape index: {}]
  %s3 = inlined_call_operand.hbm [shape: f32[256,256], index: 3, kind: input, shape index: {}]
  %s4 = inlined_call_operand.hbm [shape: f32[256,256], index: 4, kind: input, shape index: {}]
  %s5 = inlined_call_operand.vmem [shape: f32[2,256], index: 5, kind: input, shape index: {}]
  %s6 = inlined_call_operand.hbm [shape: f32[128,256], index: 6, kind: input, shape index: {}]
  %s7 = inlined_call_operand.vmem [shape: f32[1,256], index: 7, kind: input, shape index: {}]
  %s8 = inlined_call_operand.hbm [shape: f32[6,8,256], index: 8, kind: output, shape index: {0}]
  %s9 = inlined_call_operand.hbm [shape: f32[8,128], index: 9, kind: output, shape index: {1}]
  %10 = xla_tuple %s8, %s9
  %s11 = sld [smem:[#allocation0]]
  $region93: #{decoder_rnn_decode.1} parent=0
    _
  %s13 = ssub.s32 1, %s11
  %s14 = scalar_select 0, %s13, %s11
  %s16 = sshll.u32 %s0, 4
  %s17 = int_to_ptr.vmem [resolvable:$true] %s16
  %19 = dma.vmem_to_smem %s17, 128, [#allocation4], [#allocation3]
  %21 = dma.done [#allocation3], 128
  %22 = sfence
  $region1: #{decoder_rnn_decode.1} parent=0
    #allocation5 [shape = 'u8[131072]{0}', space=vmem, size = 0x20000, scoped, tag = 'input window, operand 1, single buffered']
    #allocation6 [shape = 's32[2]{0}', space=sflag, size = 0x8, scoped, tag = 'scoped memory for decoder_rnn_decode.1']
    #allocation7 [shape = 's32[2]{0}', space=sflag, size = 0x8, scoped, tag = 'scoped memory for decoder_rnn_decode.1']
    #allocation8 [shape = 'u8[262144]{0}', space=vmem, size = 0x40000, scoped, tag = 'input window, operand 3, single buffered']
    #allocation9 [shape = 's32[1]{0}', space=sflag, size = 0x4, scoped, tag = 'scoped memory for decoder_rnn_decode.1']
    #allocation10 [shape = 'u8[262144]{0}', space=vmem, size = 0x40000, scoped, tag = 'input window, operand 4, single buffered']
    #allocation11 [shape = 'u8[131072]{0}', space=vmem, size = 0x20000, scoped, tag = 'input window, operand 6, single buffered']
    #allocation12 [shape = 's32[1]{0}', space=sflag, size = 0x4, scoped, tag = 'scoped memory for decoder_rnn_decode.1']
    #allocation13 [shape = 'u8[16384]{0}', space=vmem, size = 0x4000, scoped, tag = 'output window, operand 0']
    #allocation14 [shape = 'u8[4096]{0}', space=vmem, size = 0x1000, scoped, tag = 'output window, operand 1, single buffered']
    #allocation15 [shape = 's32[1]{0}', space=sflag, size = 0x4, scoped, tag = 'scoped memory for decoder_rnn_decode.1']
    %23 = vsyncpa [#allocation6], 0
    %24 = vsyncpa [#allocation9], 0
    %25 = vsyncpa [#allocation12], 0
    %26 = vsyncpa [#allocation7], 0
    %s27 = scalar_lea.sflag [#allocation7], 1
    %28 = vsyncpa %s27, 0
    %29 = vsyncpa [#allocation15], 0
    loop: start=0, step=1, limit=8
    $region2: #{decoder_rnn_decode.1} parent=1 // loop_pre_header
      _
    $region3: #{decoder_rnn_decode.1} parent=1 // loop_header
      %s31 = sphi 0, %s35
      %p32 = scmp.ge.s32.totalorder %s31, 8
      %s38 = sphi 0, %s50
      %s39 = sphi 0, %s46
      %s40 = sphi 0, %s38
      %s41 = sphi 0, %s39
      %s42 = sphi 0, %s40
      %s43 = sphi 0, %s41
      %s51 = sphi 0, %s51
      %s53 = sphi 0, %s51
      %s54 = sphi 0, %s53
      %s68 = sphi 0, %s54
      %s74 = sphi 0, %s76
      %s77 = sphi 0, %s74
      %s78 = sphi 0, %s77
      %s94 = sphi 0, %s78
      %s98 = sphi 0, %s98
      %s100 = sphi 0, %s98
      %s101 = sphi 0, %s100
      %s115 = sphi 0, %s101
      %s119 = sphi 0, %s119
      %s121 = sphi 0, %s119
      %s122 = sphi 0, %s121
      %s136 = sphi 0, %s122
      %s140 = sphi 0, %s140
      %s142 = sphi 0, %s140
      %s143 = sphi 0, %s142
      %s157 = sphi 0, %s143
      %s161 = sphi 0, %s161
      %s163 = sphi 0, %s161
      %s164 = sphi 0, %s163
      %s178 = sphi 0, %s164
      %s182 = sphi 0, %s182
      %s184 = sphi 0, %s182
      %s185 = sphi 0, %s184
      %s199 = sphi 0, %s185
      %s207 = sphi 0, %s209
      %s210 = sphi 0, %s207
      %s211 = sphi 0, %s210
      %s227 = sphi 0, %s211
      %s233 = sphi 0, %s235
      %s236 = sphi 0, %s233
      %s237 = sphi 0, %s236
      %s253 = sphi 0, %s237
    $region4: #{decoder_rnn_decode.1} parent=1 // loop_header_branch
      %34 = sbr.rel (%p32) target = $region8
    $region5: #{decoder_rnn_decode.1} parent=1 // loop_body
      %s36 = ssub.s32 %s31, 1
      %s37 = ssub.s32 %s31, 2
      %s44 = sadd.s32 1, %s39
      %p45 = scmp.ge.s32.totalorder %s44, 6
      %s46 = scalar_select %p45, 0, %s44
      %s47 = sadd.s32 1, %s38
      %s48 = scalar_select %p45, %s47, %s38
      %p49 = scmp.ge.s32.totalorder %s48, 1
      %s50 = scalar_select %p49, 0, %s48
      %s52 = sadd.s32 %s51, 1
      %p55 = scmp.eq.s32.totalorder %s31, 5
      %p56 = scmp.ne.s32.totalorder %s51, %s53
      %p57 = scmp.eq.s32.totalorder %s31, 0
      %p58 = por %p56, %p57
      %p59 = scmp.ne.s32.totalorder %s51, %s53
      %p60 = scmp.eq.s32.totalorder %s36, 5
      %p61 = por %p59, %p60
      %p62 = scmp.ne.s32.totalorder %s53, %s54
      %p63 = scmp.eq.s32.totalorder %s36, 0
      %p64 = por %p62, %p63
      %p65 = scmp.ne.s32.totalorder %s53, %s54
      %p66 = scmp.eq.s32.totalorder %s37, 5
      %p67 = por %p65, %p66
      %p69 = scmp.ne.s32.totalorder %s54, %s68
      %p70 = scmp.eq.s32.totalorder %s37, 0
      %p71 = por %p69, %p70
      %s72 = ssub.s32 %s38, %s50
      %p73 = scmp.eq.s32.totalorder %s72, 0
      %s75 = sadd.s32 %s74, 1
      %s76 = scalar_select %p73, %s74, %s75
      %p79 = pneg %p73
      %p80 = scmp.eq.s32.totalorder %s31, 5
      %p81 = por %p79, %p80
      %p82 = scmp.ne.s32.totalorder %s74, %s77
      %p83 = scmp.eq.s32.totalorder %s31, 0
      %p84 = por %p82, %p83
      %p85 = scmp.ne.s32.totalorder %s74, %s77
      %p86 = scmp.eq.s32.totalorder %s36, 5
      %p87 = por %p85, %p86
      %p88 = scmp.ne.s32.totalorder %s77, %s78
      %p89 = scmp.eq.s32.totalorder %s36, 0
      %p90 = por %p88, %p89
      %p91 = scmp.ne.s32.totalorder %s77, %s78
      %p92 = scmp.eq.s32.totalorder %s37, 5
      %p93 = por %p91, %p92
      %p95 = scmp.ne.s32.totalorder %s78, %s94
      %p96 = scmp.eq.s32.totalorder %s37, 0
      %p97 = por %p95, %p96
      %s99 = sadd.s32 %s98, 1
      %p102 = scmp.eq.s32.totalorder %s31, 5
      %p103 = scmp.ne.s32.totalorder %s98, %s100
      %p104 = scmp.eq.s32.totalorder %s31, 0
      %p105 = por %p103, %p104
      %p106 = scmp.ne.s32.totalorder %s98, %s100
      %p107 = scmp.eq.s32.totalorder %s36, 5
      %p108 = por %p106, %p107
      %p109 = scmp.ne.s32.totalorder %s100, %s101
      %p110 = scmp.eq.s32.totalorder %s36, 0
      %p111 = por %p109, %p110
      %p112 = scmp.ne.s32.totalorder %s100, %s101
      %p113 = scmp.eq.s32.totalorder %s37, 5
      %p114 = por %p112, %p113
      %p116 = scmp.ne.s32.totalorder %s101, %s115
      %p117 = scmp.eq.s32.totalorder %s37, 0
      %p118 = por %p116, %p117
      %s120 = sadd.s32 %s119, 1
      %p123 = scmp.eq.s32.totalorder %s31, 5
      %p124 = scmp.ne.s32.totalorder %s119, %s121
      %p125 = scmp.eq.s32.totalorder %s31, 0
      %p126 = por %p124, %p125
      %p127 = scmp.ne.s32.totalorder %s119, %s121
      %p128 = scmp.eq.s32.totalorder %s36, 5
      %p129 = por %p127, %p128
      %p130 = scmp.ne.s32.totalorder %s121, %s122
      %p131 = scmp.eq.s32.totalorder %s36, 0
      %p132 = por %p130, %p131
      %p133 = scmp.ne.s32.totalorder %s121, %s122
      %p134 = scmp.eq.s32.totalorder %s37, 5
      %p135 = por %p133, %p134
      %p137 = scmp.ne.s32.totalorder %s122, %s136
      %p138 = scmp.eq.s32.totalorder %s37, 0
      %p139 = por %p137, %p138
      %s141 = sadd.s32 %s140, 1
      %p144 = scmp.eq.s32.totalorder %s31, 5
      %p145 = scmp.ne.s32.totalorder %s140, %s142
      %p146 = scmp.eq.s32.totalorder %s31, 0
      %p147 = por %p145, %p146
      %p148 = scmp.ne.s32.totalorder %s140, %s142
      %p149 = scmp.eq.s32.totalorder %s36, 5
      %p150 = por %p148, %p149
      %p151 = scmp.ne.s32.totalorder %s142, %s143
      %p152 = scmp.eq.s32.totalorder %s36, 0
      %p153 = por %p151, %p152
      %p154 = scmp.ne.s32.totalorder %s142, %s143
      %p155 = scmp.eq.s32.totalorder %s37, 5
      %p156 = por %p154, %p155
      %p158 = scmp.ne.s32.totalorder %s143, %s157
      %p159 = scmp.eq.s32.totalorder %s37, 0
      %p160 = por %p158, %p159
      %s162 = sadd.s32 %s161, 1
      %p165 = scmp.eq.s32.totalorder %s31, 5
      %p166 = scmp.ne.s32.totalorder %s161, %s163
      %p167 = scmp.eq.s32.totalorder %s31, 0
      %p168 = por %p166, %p167
      %p169 = scmp.ne.s32.totalorder %s161, %s163
      %p170 = scmp.eq.s32.totalorder %s36, 5
      %p171 = por %p169, %p170
      %p172 = scmp.ne.s32.totalorder %s163, %s164
      %p173 = scmp.eq.s32.totalorder %s36, 0
      %p174 = por %p172, %p173
      %p175 = scmp.ne.s32.totalorder %s163, %s164
      %p176 = scmp.eq.s32.totalorder %s37, 5
      %p177 = por %p175, %p176
      %p179 = scmp.ne.s32.totalorder %s164, %s178
      %p180 = scmp.eq.s32.totalorder %s37, 0
      %p181 = por %p179, %p180
      %s183 = sadd.s32 %s182, 1
      %p186 = scmp.eq.s32.totalorder %s31, 5
      %p187 = scmp.ne.s32.totalorder %s182, %s184
      %p188 = scmp.eq.s32.totalorder %s31, 0
      %p189 = por %p187, %p188
      %p190 = scmp.ne.s32.totalorder %s182, %s184
      %p191 = scmp.eq.s32.totalorder %s36, 5
      %p192 = por %p190, %p191
      %p193 = scmp.ne.s32.totalorder %s184, %s185
      %p194 = scmp.eq.s32.totalorder %s36, 0
      %p195 = por %p193, %p194
      %p196 = scmp.ne.s32.totalorder %s184, %s185
      %p197 = scmp.eq.s32.totalorder %s37, 5
      %p198 = por %p196, %p197
      %p200 = scmp.ne.s32.totalorder %s185, %s199
      %p201 = scmp.eq.s32.totalorder %s37, 0
      %p202 = por %p200, %p201
      %s203 = ssub.s32 %s39, %s46
      %s204 = ssub.s32 %s38, %s50
      %s205 = sor.u32 %s203, %s204
      %p206 = scmp.eq.s32.totalorder %s205, 0
      %s208 = sadd.s32 %s207, 1
      %s209 = scalar_select %p206, %s207, %s208
      %p212 = pneg %p206
      %p213 = scmp.eq.s32.totalorder %s31, 5
      %p214 = por %p212, %p213
      %p215 = scmp.ne.s32.totalorder %s207, %s210
      %p216 = scmp.eq.s32.totalorder %s31, 0
      %p217 = por %p215, %p216
      %p218 = scmp.ne.s32.totalorder %s207, %s210
      %p219 = scmp.eq.s32.totalorder %s36, 5
      %p220 = por %p218, %p219
      %p221 = scmp.ne.s32.totalorder %s210, %s211
      %p222 = scmp.eq.s32.totalorder %s36, 0
      %p223 = por %p221, %p222
      %p224 = scmp.ne.s32.totalorder %s210, %s211
      %p225 = scmp.eq.s32.totalorder %s37, 5
      %p226 = por %p224, %p225
      %p228 = scmp.ne.s32.totalorder %s211, %s227
      %p229 = scmp.eq.s32.totalorder %s37, 0
      %p230 = por %p228, %p229
      %s231 = ssub.s32 %s38, %s50
      %p232 = scmp.eq.s32.totalorder %s231, 0
      %s234 = sadd.s32 %s233, 1
      %s235 = scalar_select %p232, %s233, %s234
      %p238 = pneg %p232
      %p239 = scmp.eq.s32.totalorder %s31, 5
      %p240 = por %p238, %p239
      %p241 = scmp.ne.s32.totalorder %s233, %s236
      %p242 = scmp.eq.s32.totalorder %s31, 0
      %p243 = por %p241, %p242
      %p244 = scmp.ne.s32.totalorder %s233, %s236
      %p245 = scmp.eq.s32.totalorder %s36, 5
      %p246 = por %p244, %p245
      %p247 = scmp.ne.s32.totalorder %s236, %s237
      %p248 = scmp.eq.s32.totalorder %s36, 0
      %p249 = por %p247, %p248
      %p250 = scmp.ne.s32.totalorder %s236, %s237
      %p251 = scmp.eq.s32.totalorder %s37, 5
      %p252 = por %p250, %p251
      %p254 = scmp.ne.s32.totalorder %s237, %s253
      %p255 = scmp.eq.s32.totalorder %s37, 0
      %p256 = por %p254, %p255
      %p257 = scmp.le.s32.totalorder 1, %s31
      %p258 = scmp.lt.s32.totalorder %s31, 7
      %p259 = pnand %p257, %p258
      %p260 = pneg %p259
      // Predicated region
      $region9: #{decoder_rnn_decode.1} parent=5 // pred_check
        _
      $region10: #{decoder_rnn_decode.1} parent=5 // pred_check_branch
        %262 = sbr.rel (%p259) target = $region12
      $region11: #{decoder_rnn_decode.1} parent=5 // pred_region
        %s263 = ssub.s32 %s31, 1
        // Predicated region
        $region13: #{decoder_rnn_decode.1} parent=11 // pred_check
          %p264 = pneg %p64
        $region14: #{decoder_rnn_decode.1} parent=11 // pred_check_branch
          %266 = sbr.rel (%p264) target = $region16
        $region15: #{decoder_rnn_decode.1} parent=11 // pred_region
          %268 = vsyncadd [#allocation6], 0
          %s269 = sshll.u32 %s1, 4
          %s270 = int_to_ptr.hbm [resolvable:$true] %s269
          %s271 = sshll.u32 [#allocation5], 4
          %s272 = int_to_ptr.vmem [resolvable:$true] %s271
          %277 = dma.hbm_to_vmem [thread:$0]  %s270, 4096, %s272, [#allocation6], 128, 128, 8
        $region16: #{decoder_rnn_decode.1} parent=11 // pred_fallthru
          _
        // Predicated region
        $region17: #{decoder_rnn_decode.1} parent=11 // pred_check
          %p278 = pneg %p90
        $region18: #{decoder_rnn_decode.1} parent=11 // pred_check_branch
          %280 = sbr.rel (%p278) target = $region20
        $region19: #{decoder_rnn_decode.1} parent=11 // pred_region
          %p281 = scmp.lt.s32.totalorder %s40, 0
          %s282 = scalar_select %p281, %s40, 0
          %s283 = smul.addr %s282, 8
          %s284 = scalar_lea.vmem %s2, %s283
        $region20: #{decoder_rnn_decode.1} parent=11 // pred_fallthru
          _
        // Predicated region
        $region21: #{decoder_rnn_decode.1} parent=11 // pred_check
          %p285 = pneg %p111
        $region22: #{decoder_rnn_decode.1} parent=11 // pred_check_branch
          %287 = sbr.rel (%p285) target = $region24
        $region23: #{decoder_rnn_decode.1} parent=11 // pred_region
          %289 = vsyncadd [#allocation9], 0
          %s290 = sshll.u32 %s3, 4
          %s291 = int_to_ptr.hbm [resolvable:$true] %s290
          %s292 = sshll.u32 [#allocation8], 4
          %s293 = int_to_ptr.vmem [resolvable:$true] %s292
          %298 = dma.hbm_to_vmem [thread:$0]  %s291, 8192, %s293, [#allocation9], 256, 256, 16
        $region24: #{decoder_rnn_decode.1} parent=11 // pred_fallthru
          _
        // Predicated region
        $region25: #{decoder_rnn_decode.1} parent=11 // pred_check
          %p299 = pneg %p132
        $region26: #{decoder_rnn_decode.1} parent=11 // pred_check_branch
          %301 = sbr.rel (%p299) target = $region28
        $region27: #{decoder_rnn_decode.1} parent=11 // pred_region
          %303 = vsyncadd [#allocation9], 0
          %s304 = sshll.u32 %s4, 4
          %s305 = int_to_ptr.hbm [resolvable:$true] %s304
          %s306 = sshll.u32 [#allocation10], 4
          %s307 = int_to_ptr.vmem [resolvable:$true] %s306
          %312 = dma.hbm_to_vmem [thread:$0]  %s305, 8192, %s307, [#allocation9], 256, 256, 16
        $region28: #{decoder_rnn_decode.1} parent=11 // pred_fallthru
          _
        // Predicated region
        $region29: #{decoder_rnn_decode.1} parent=11 // pred_check
          %p313 = pneg %p153
        $region30: #{decoder_rnn_decode.1} parent=11 // pred_check_branch
          %315 = sbr.rel (%p313) target = $region32
        $region31: #{decoder_rnn_decode.1} parent=11 // pred_region
          _
        $region32: #{decoder_rnn_decode.1} parent=11 // pred_fallthru
          _
        // Predicated region
        $region33: #{decoder_rnn_decode.1} parent=11 // pred_check
          %p316 = pneg %p174
        $region34: #{decoder_rnn_decode.1} parent=11 // pred_check_branch
          %318 = sbr.rel (%p316) target = $region36
        $region35: #{decoder_rnn_decode.1} parent=11 // pred_region
          %320 = vsyncadd [#allocation12], 0
          %s321 = sshll.u32 %s6, 4
          %s322 = int_to_ptr.hbm [resolvable:$true] %s321
          %s323 = sshll.u32 [#allocation11], 4
          %s324 = int_to_ptr.vmem [resolvable:$true] %s323
          %329 = dma.hbm_to_vmem [thread:$0]  %s322, 4096, %s324, [#allocation12], 256, 256, 16
        $region36: #{decoder_rnn_decode.1} parent=11 // pred_fallthru
          _
        // Predicated region
        $region37: #{decoder_rnn_decode.1} parent=11 // pred_check
          %p330 = pneg %p195
        $region38: #{decoder_rnn_decode.1} parent=11 // pred_check_branch
          %332 = sbr.rel (%p330) target = $region40
        $region39: #{decoder_rnn_decode.1} parent=11 // pred_region
          _
        $region40: #{decoder_rnn_decode.1} parent=11 // pred_fallthru
          _
      $region12: #{decoder_rnn_decode.1} parent=5 // pred_fallthru
        _
      %p333 = scmp.lt.s32.totalorder %s31, 6
      // Predicated region
      $region41: #{decoder_rnn_decode.1} parent=5 // pred_check
        %p334 = pneg %p333
      $region42: #{decoder_rnn_decode.1} parent=5 // pred_check_branch
        %336 = sbr.rel (%p334) target = $region44
      $region43: #{decoder_rnn_decode.1} parent=5 // pred_region
        _
      $region44: #{decoder_rnn_decode.1} parent=5 // pred_fallthru
        _
      %p337 = scmp.le.s32.totalorder 1, %s31
      %p338 = scmp.lt.s32.totalorder %s31, 7
      %p339 = pnand %p337, %p338
      %p340 = pneg %p339
      // Predicated region
      $region45: #{decoder_rnn_decode.1} parent=5 // pred_check
        _
      $region46: #{decoder_rnn_decode.1} parent=5 // pred_check_branch
        %342 = sbr.rel (%p339) target = $region48
      $region47: #{decoder_rnn_decode.1} parent=5 // pred_region
        %s343 = ssub.s32 %s31, 1
        // Predicated region
        $region49: #{decoder_rnn_decode.1} parent=47 // pred_check
          %p344 = pneg %p64
        $region50: #{decoder_rnn_decode.1} parent=47 // pred_check_branch
          %346 = sbr.rel (%p344) target = $region52
        $region51: #{decoder_rnn_decode.1} parent=47 // pred_region
          %348 = dma.done [#allocation6], 4096
        $region52: #{decoder_rnn_decode.1} parent=47 // pred_fallthru
          _
        // Predicated region
        $region53: #{decoder_rnn_decode.1} parent=47 // pred_check
          %p349 = pneg %p111
        $region54: #{decoder_rnn_decode.1} parent=47 // pred_check_branch
          %351 = sbr.rel (%p349) target = $region56
        $region55: #{decoder_rnn_decode.1} parent=47 // pred_region
          %353 = dma.done [#allocation9], 8192
        $region56: #{decoder_rnn_decode.1} parent=47 // pred_fallthru
          _
        // Predicated region
        $region57: #{decoder_rnn_decode.1} parent=47 // pred_check
          %p354 = pneg %p132
        $region58: #{decoder_rnn_decode.1} parent=47 // pred_check_branch
          %356 = sbr.rel (%p354) target = $region60
        $region59: #{decoder_rnn_decode.1} parent=47 // pred_region
          %358 = dma.done [#allocation9], 8192
        $region60: #{decoder_rnn_decode.1} parent=47 // pred_fallthru
          _
        // Predicated region
        $region61: #{decoder_rnn_decode.1} parent=47 // pred_check
          %p359 = pneg %p174
        $region62: #{decoder_rnn_decode.1} parent=47 // pred_check_branch
          %361 = sbr.rel (%p359) target = $region64
        $region63: #{decoder_rnn_decode.1} parent=47 // pred_region
          %363 = dma.done [#allocation12], 4096
        $region64: #{decoder_rnn_decode.1} parent=47 // pred_fallthru
          _
        %p364 = pneg %p64
        %p365 = pneg %p61
        %p366 = scmp.lt.s32.totalorder %s40, 0
        %s367 = scalar_select %p366, %s40, 0
        %s368 = smul.addr %s367, 8
        %s369 = scalar_lea.vmem %s2, %s368
        %p370 = pneg %p90
        %p371 = pneg %p87
        %p372 = pneg %p111
        %p373 = pneg %p108
        %p374 = pneg %p132
        %p375 = pneg %p129
        %p376 = pneg %p153
        %p377 = pneg %p150
        %p378 = pneg %p174
        %p379 = pneg %p171
        %p380 = pneg %p195
        %p381 = pneg %p192
        %p382 = pneg %p223
        %p383 = pneg %p220
        %s384 = sand.u32 %s210, 1
        %s385 = scalar_lea.sflag [#allocation7], %s384
        %s386 = sand.u32 %s210, 1
        %s387 = smul.addr %s386, 16
        %s388 = scalar_lea.vmem [#allocation13], %s387
        %p389 = pneg %p249
        %p390 = pneg %p246
        %p391 = scmp.lt.s32.totalorder %s40, 0
        %s392 = scalar_select %p391, %s40, 0
        %s393 = smul.addr %s392, 8
        %s394 = scalar_lea.vmem %s2, %s393
        %p395 = scmp.eq.s32.totalorder %s41, 0
        // Predicated region
        $region65: #{decoder_rnn_decode.1} parent=47 // pred_check
          %p396 = pneg %p395
        $region66: #{decoder_rnn_decode.1} parent=47 // pred_check_branch
          %398 = sbr.rel (%p396) target = $region68
        $region67: #{decoder_rnn_decode.1} parent=47 // pred_region
          %v399 = vld [vmem:[%s394] sm:$0xff]
          %400 = vst [vmem:[#allocation2] sm:$0xff] %v399
        $region68: #{decoder_rnn_decode.1} parent=47 // pred_fallthru
          _
        %s401 = smul.u32 %s40, 8
        %s402 = sshra.s32 %s401, 7
        %s403 = sand.u32 %s401, 127
        %s404 = sadd.s32 %s402, %s41
        %s405 = smul.u32 %s404, 128
        %s406 = sshra.s32 %s401, 7
        %s407 = sand.u32 %s401, 127
        %s408 = sadd.s32 %s405, %s407
        %s409 = sld [smem:[#allocation4 + %s408]]
        %s410 = scalar_lea.vmem [#allocation5], %s409
        %v411 = vld [vmem:[%s410] sm:$0x1]
        %s412 = sadd.s32 %s401, 1
        %s413 = sshra.s32 %s412, 7
        %s414 = sand.u32 %s412, 127
        %s415 = sadd.s32 %s413, %s41
        %s416 = smul.u32 %s415, 128
        %s417 = sshra.s32 %s412, 7
        %s418 = sand.u32 %s412, 127
        %s419 = sadd.s32 %s416, %s418
        %s420 = sld [smem:[#allocation4 + %s419]]
        %s421 = scalar_lea.vmem [#allocation5], %s420
        %v422 = vld [vmem:[%s421] sm:$0x1]
        %s423 = sadd.s32 %s401, 2
        %s424 = sshra.s32 %s423, 7
        %s425 = sand.u32 %s423, 127
        %s426 = sadd.s32 %s424, %s41
        %s427 = smul.u32 %s426, 128
        %s428 = sshra.s32 %s423, 7
        %s429 = sand.u32 %s423, 127
        %s430 = sadd.s32 %s427, %s429
        %s431 = sld [smem:[#allocation4 + %s430]]
        %s432 = scalar_lea.vmem [#allocation5], %s431
        %v433 = vld [vmem:[%s432] sm:$0x1]
        %s434 = sadd.s32 %s401, 3
        %s435 = sshra.s32 %s434, 7
        %s436 = sand.u32 %s434, 127
        %s437 = sadd.s32 %s435, %s41
        %s438 = smul.u32 %s437, 128
        %s439 = sshra.s32 %s434, 7
        %s440 = sand.u32 %s434, 127
        %s441 = sadd.s32 %s438, %s440
        %s442 = sld [smem:[#allocation4 + %s441]]
        %s443 = scalar_lea.vmem [#allocation5], %s442
        %v444 = vld [vmem:[%s443] sm:$0x1]
        %s445 = sadd.s32 %s401, 4
        %s446 = sshra.s32 %s445, 7
        %s447 = sand.u32 %s445, 127
        %s448 = sadd.s32 %s446, %s41
        %s449 = smul.u32 %s448, 128
        %s450 = sshra.s32 %s445, 7
        %s451 = sand.u32 %s445, 127
        %s452 = sadd.s32 %s449, %s451
        %s453 = sld [smem:[#allocation4 + %s452]]
        %s454 = scalar_lea.vmem [#allocation5], %s453
        %v455 = vld [vmem:[%s454] sm:$0x1]
        %s456 = sadd.s32 %s401, 5
        %s457 = sshra.s32 %s456, 7
        %s458 = sand.u32 %s456, 127
        %s459 = sadd.s32 %s457, %s41
        %s460 = smul.u32 %s459, 128
        %s461 = sshra.s32 %s456, 7
        %s462 = sand.u32 %s456, 127
        %s463 = sadd.s32 %s460, %s462
        %s464 = sld [smem:[#allocation4 + %s463]]
        %s465 = scalar_lea.vmem [#allocation5], %s464
        %v466 = vld [vmem:[%s465] sm:$0x1]
        %s467 = sadd.s32 %s401, 6
        %s468 = sshra.s32 %s467, 7
        %s469 = sand.u32 %s467, 127
        %s470 = sadd.s32 %s468, %s41
        %s471 = smul.u32 %s470, 128
        %s472 = sshra.s32 %s467, 7
        %s473 = sand.u32 %s467, 127
        %s474 = sadd.s32 %s471, %s473
        %s475 = sld [smem:[#allocation4 + %s474]]
        %s476 = scalar_lea.vmem [#allocation5], %s475
        %v477 = vld [vmem:[%s476] sm:$0x1]
        %s478 = sadd.s32 %s401, 7
        %s479 = sshra.s32 %s478, 7
        %s480 = sand.u32 %s478, 127
        %s481 = sadd.s32 %s479, %s41
        %s482 = smul.u32 %s481, 128
        %s483 = sshra.s32 %s478, 7
        %s484 = sand.u32 %s478, 127
        %s485 = sadd.s32 %s482, %s484
        %s486 = sld [smem:[#allocation4 + %s485]]
        %s487 = scalar_lea.vmem [#allocation5], %s486
        %v488 = vld [vmem:[%s487] sm:$0x1]
        %v490 = vrot.slane %v422, 7
        %v493 = vrot.slane %v433, 6
        %v496 = vrot.slane %v444, 5
        %v499 = vrot.slane %v455, 4
        %v502 = vrot.slane %v466, 3
        %v505 = vrot.slane %v477, 2
        %v508 = vrot.slane %v488, 1
        %vm510 = vcmask 1040384
        %v511 = vsel %vm510, %v411, %v490
        %vm512 = vcmask 1041408
        %v513 = vsel %vm512, %v511, %v493
        %vm514 = vcmask 1042432
        %v515 = vsel %vm514, %v513, %v496
        %vm516 = vcmask 1043456
        %v517 = vsel %vm516, %v515, %v499
        %vm518 = vcmask 1044480
        %v519 = vsel %vm518, %v517, %v502
        %vm520 = vcmask 1045504
        %v521 = vsel %vm520, %v519, %v505
        %vm522 = vcmask 1046528
        %v523 = vsel %vm522, %v521, %v508
        %v524 = vld [vmem:[#allocation2] sm:$0xff]
        %v525 = vld [vmem:[%s5] ss:$2 sm:$0x3]
        %s526 = scalar_lea.vmem %s5, 1
        %v527 = vld [vmem:[%s526] ss:$2 sm:$0x3]
        %v528 = vmax.f32 %v523, 0.0
        %v529 = vld [vmem:[#allocation8] sm:$0xff]
        %v530 = vld [vmem:[#allocation8 + $0x8] sm:$0xff]
        %v531 = vld [vmem:[#allocation8 + $0x10] sm:$0xff]
        %v532 = vld [vmem:[#allocation8 + $0x18] sm:$0xff]
        %v533 = vld [vmem:[#allocation8 + $0x20] sm:$0xff]
        %v534 = vld [vmem:[#allocation8 + $0x28] sm:$0xff]
        %v535 = vld [vmem:[#allocation8 + $0x30] sm:$0xff]
        %v536 = vld [vmem:[#allocation8 + $0x38] sm:$0xff]
        %v537 = vld [vmem:[#allocation8 + $0x40] sm:$0xff]
        %v538 = vld [vmem:[#allocation8 + $0x48] sm:$0xff]
        %v539 = vld [vmem:[#allocation8 + $0x50] sm:$0xff]
        %v540 = vld [vmem:[#allocation8 + $0x58] sm:$0xff]
        %v541 = vld [vmem:[#allocation8 + $0x60] sm:$0xff]
        %v542 = vld [vmem:[#allocation8 + $0x68] sm:$0xff]
        %v543 = vld [vmem:[#allocation8 + $0x70] sm:$0xff]
        %v544 = vld [vmem:[#allocation8 + $0x78] sm:$0xff]
        %v545 = vld [vmem:[#allocation8 + $0x80] sm:$0xff]
        %v546 = vld [vmem:[#allocation8 + $0x88] sm:$0xff]
        %v547 = vld [vmem:[#allocation8 + $0x90] sm:$0xff]
        %v548 = vld [vmem:[#allocation8 + $0x98] sm:$0xff]
        %v549 = vld [vmem:[#allocation8 + $0xa0] sm:$0xff]
        %v550 = vld [vmem:[#allocation8 + $0xa8] sm:$0xff]
        %v551 = vld [vmem:[#allocation8 + $0xb0] sm:$0xff]
        %v552 = vld [vmem:[#allocation8 + $0xb8] sm:$0xff]
        %v553 = vld [vmem:[#allocation8 + $0xc0] sm:$0xff]
        %v554 = vld [vmem:[#allocation8 + $0xc8] sm:$0xff]
        %v555 = vld [vmem:[#allocation8 + $0xd0] sm:$0xff]
        %v556 = vld [vmem:[#allocation8 + $0xd8] sm:$0xff]
        %v557 = vld [vmem:[#allocation8 + $0xe0] sm:$0xff]
        %v558 = vld [vmem:[#allocation8 + $0xe8] sm:$0xff]
        %v559 = vld [vmem:[#allocation8 + $0xf0] sm:$0xff]
        %v560 = vld [vmem:[#allocation8 + $0xf8] sm:$0xff]
        %v561 = vld [vmem:[#allocation8 + $0x100] sm:$0xff]
        %v562 = vld [vmem:[#allocation8 + $0x108] sm:$0xff]
        %v563 = vld [vmem:[#allocation8 + $0x110] sm:$0xff]
        %v564 = vld [vmem:[#allocation8 + $0x118] sm:$0xff]
        %v565 = vld [vmem:[#allocation8 + $0x120] sm:$0xff]
        %v566 = vld [vmem:[#allocation8 + $0x128] sm:$0xff]
        %v567 = vld [vmem:[#allocation8 + $0x130] sm:$0xff]
        %v568 = vld [vmem:[#allocation8 + $0x138] sm:$0xff]
        %v569 = vld [vmem:[#allocation8 + $0x140] sm:$0xff]
        %v570 = vld [vmem:[#allocation8 + $0x148] sm:$0xff]
        %v571 = vld [vmem:[#allocation8 + $0x150] sm:$0xff]
        %v572 = vld [vmem:[#allocation8 + $0x158] sm:$0xff]
        %v573 = vld [vmem:[#allocation8 + $0x160] sm:$0xff]
        %v574 = vld [vmem:[#allocation8 + $0x168] sm:$0xff]
        %v575 = vld [vmem:[#allocation8 + $0x170] sm:$0xff]
        %v576 = vld [vmem:[#allocation8 + $0x178] sm:$0xff]
        %v577 = vld [vmem:[#allocation8 + $0x180] sm:$0xff]
        %v578 = vld [vmem:[#allocation8 + $0x188] sm:$0xff]
        %v579 = vld [vmem:[#allocation8 + $0x190] sm:$0xff]
        %v580 = vld [vmem:[#allocation8 + $0x198] sm:$0xff]
        %v581 = vld [vmem:[#allocation8 + $0x1a0] sm:$0xff]
        %v582 = vld [vmem:[#allocation8 + $0x1a8] sm:$0xff]
        %v583 = vld [vmem:[#allocation8 + $0x1b0] sm:$0xff]
        %v584 = vld [vmem:[#allocation8 + $0x1b8] sm:$0xff]
        %v585 = vld [vmem:[#allocation8 + $0x1c0] sm:$0xff]
        %v586 = vld [vmem:[#allocation8 + $0x1c8] sm:$0xff]
        %v587 = vld [vmem:[#allocation8 + $0x1d0] sm:$0xff]
        %v588 = vld [vmem:[#allocation8 + $0x1d8] sm:$0xff]
        %v589 = vld [vmem:[#allocation8 + $0x1e0] sm:$0xff]
        %v590 = vld [vmem:[#allocation8 + $0x1e8] sm:$0xff]
        %v591 = vld [vmem:[#allocation8 + $0x1f0] sm:$0xff]
        %v592 = vld [vmem:[#allocation8 + $0x1f8] sm:$0xff]
        %v594 = vperm.slane %v525, 0
        %v595 = vperm.slane %v525, 1
        %598 = vmatpush.msra.mxu0 %v559
        %599 = vmatpush.msra.mxu0 %v557
        %600 = vmatpush.msra.mxu0 %v555
        %601 = vmatpush.msra.mxu0 %v553
        %602 = vmatpush.msra.mxu0 %v551
        %603 = vmatpush.msra.mxu0 %v549
        %604 = vmatpush.msra.mxu0 %v547
        %605 = vmatpush.msra.mxu0 %v545
        %606 = vmatpush.msra.mxu0 %v543
        %607 = vmatpush.msra.mxu0 %v541
        %608 = vmatpush.msra.mxu0 %v539
        %609 = vmatpush.msra.mxu0 %v537
        %610 = vmatpush.msra.mxu0 %v535
        %611 = vmatpush.msra.mxu0 %v533
        %612 = vmatpush.msra.mxu0 %v531
        %613 = vmatpush.msra.mxu0 %v529
        %614 = vmatmul.f32.gmra.mxu0 %v528
        %v615 = vpop.f32.mrf.mxu0
        %v616 = vadd.f32 %v594, %v615
        %617 = vdwg.mxu0
        %618 = vmatpush.msra.mxu0 %v591
        %619 = vmatpush.msra.mxu0 %v589
        %620 = vmatpush.msra.mxu0 %v587
        %621 = vmatpush.msra.mxu0 %v585
        %622 = vmatpush.msra.mxu0 %v583
        %623 = vmatpush.msra.mxu0 %v581
        %624 = vmatpush.msra.mxu0 %v579
        %625 = vmatpush.msra.mxu0 %v577
        %626 = vmatpush.msra.mxu0 %v575
        %627 = vmatpush.msra.mxu0 %v573
        %628 = vmatpush.msra.mxu0 %v571
        %629 = vmatpush.msra.mxu0 %v569
        %630 = vmatpush.msra.mxu0 %v567
        %631 = vmatpush.msra.mxu0 %v565
        %632 = vmatpush.msra.mxu0 %v563
        %633 = vmatpush.msra.mxu0 %v561
        %634 = vmatmul.f32.gmra.mxu0 %v524
        %v635 = vpop.f32.mrf.mxu0
        %v636 = vadd.f32 %v616, %v635
        %637 = vdwg.mxu0
        %638 = vmatpush.msra.mxu0 %v560
        %639 = vmatpush.msra.mxu0 %v558
        %640 = vmatpush.msra.mxu0 %v556
        %641 = vmatpush.msra.mxu0 %v554
        %642 = vmatpush.msra.mxu0 %v552
        %643 = vmatpush.msra.mxu0 %v550
        %644 = vmatpush.msra.mxu0 %v548
        %645 = vmatpush.msra.mxu0 %v546
        %646 = vmatpush.msra.mxu0 %v544
        %647 = vmatpush.msra.mxu0 %v542
        %648 = vmatpush.msra.mxu0 %v540
        %649 = vmatpush.msra.mxu0 %v538
        %650 = vmatpush.msra.mxu0 %v536
        %651 = vmatpush.msra.mxu0 %v534
        %652 = vmatpush.msra.mxu0 %v532
        %653 = vmatpush.msra.mxu0 %v530
        %654 = vmatmul.f32.gmra.mxu0 %v528
        %v655 = vpop.f32.mrf.mxu0
        %v656 = vadd.f32 %v595, %v655
        %657 = vdwg.mxu0
        %658 = vmatpush.msra.mxu0 %v592
        %659 = vmatpush.msra.mxu0 %v590
        %660 = vmatpush.msra.mxu0 %v588
        %661 = vmatpush.msra.mxu0 %v586
        %662 = vmatpush.msra.mxu0 %v584
        %663 = vmatpush.msra.mxu0 %v582
        %664 = vmatpush.msra.mxu0 %v580
        %665 = vmatpush.msra.mxu0 %v578
        %666 = vmatpush.msra.mxu0 %v576
        %667 = vmatpush.msra.mxu0 %v574
        %668 = vmatpush.msra.mxu0 %v572
        %669 = vmatpush.msra.mxu0 %v570
        %670 = vmatpush.msra.mxu0 %v568
        %671 = vmatpush.msra.mxu0 %v566
        %672 = vmatpush.msra.mxu0 %v564
        %673 = vmatpush.msra.mxu0 %v562
        %674 = vmatmul.f32.gmra.mxu0 %v524
        %v675 = vpop.f32.mrf.mxu0
        %v676 = vadd.f32 %v656, %v675
        %677 = vdwg.mxu0
        %v678 = vxor.u32 %v636, 2147483648
        %v679 = vmul.f32 %v678, 1.442695
        %v680 = vpow.pop %v679
        %v681 = vadd.f32 %v680, 1.0
        %v682 = vrcp.pop %v681
        %v683 = vmul.f32 %v681, %v682
        %v684 = vsub.f32 1.0, %v683
        %v685 = vmul.f32 %v682, %v684
        %v686 = vadd.f32 %v682, %v685
        %vm687 = vweird.f32 %v681
        %vm688 = vweird.f32 %v682
        %vm689 = vmor %vm687, %vm688
        %v690 = vsel %vm689, %v682, %v686
        %v691 = vand.u32 2147483647, %v681
        %vm692 = vcmp.eq.f32.partialorder %v691, 8.507059e+37
        %v693 = vand.u32 %v681, 2147483648
        %v694 = vor.u32 1.1754944e-38, %v693
        %v695 = vsel %vm692, %v694, %v690
        %v696 = vmul.f32 1.0, %v695
        %v697 = vxor.u32 %v676, 2147483648
        %v698 = vmul.f32 %v697, 1.442695
        %v699 = vpow.pop %v698
        %v700 = vadd.f32 %v699, 1.0
        %v701 = vrcp.pop %v700
        %v702 = vmul.f32 %v700, %v701
        %v703 = vsub.f32 1.0, %v702
        %v704 = vmul.f32 %v701, %v703
        %v705 = vadd.f32 %v701, %v704
        %vm706 = vweird.f32 %v700
        %vm707 = vweird.f32 %v701
        %vm708 = vmor %vm706, %vm707
        %v709 = vsel %vm708, %v701, %v705
        %v710 = vand.u32 2147483647, %v700
        %vm711 = vcmp.eq.f32.partialorder %v710, 8.507059e+37
        %v712 = vand.u32 %v700, 2147483648
        %v713 = vor.u32 1.1754944e-38, %v712
        %v714 = vsel %vm711, %v713, %v709
        %v715 = vmul.f32 1.0, %v714
        %v716 = vld [vmem:[#allocation10] sm:$0xff]
        %v717 = vld [vmem:[#allocation10 + $0x8] sm:$0xff]
        %v718 = vld [vmem:[#allocation10 + $0x10] sm:$0xff]
        %v719 = vld [vmem:[#allocation10 + $0x18] sm:$0xff]
        %v720 = vld [vmem:[#allocation10 + $0x20] sm:$0xff]
        %v721 = vld [vmem:[#allocation10 + $0x28] sm:$0xff]
        %v722 = vld [vmem:[#allocation10 + $0x30] sm:$0xff]
        %v723 = vld [vmem:[#allocation10 + $0x38] sm:$0xff]
        %v724 = vld [vmem:[#allocation10 + $0x40] sm:$0xff]
        %v725 = vld [vmem:[#allocation10 + $0x48] sm:$0xff]
        %v726 = vld [vmem:[#allocation10 + $0x50] sm:$0xff]
        %v727 = vld [vmem:[#allocation10 + $0x58] sm:$0xff]
        %v728 = vld [vmem:[#allocation10 + $0x60] sm:$0xff]
        %v729 = vld [vmem:[#allocation10 + $0x68] sm:$0xff]
        %v730 = vld [vmem:[#allocation10 + $0x70] sm:$0xff]
        %v731 = vld [vmem:[#allocation10 + $0x78] sm:$0xff]
        %v732 = vld [vmem:[#allocation10 + $0x80] sm:$0xff]
        %v733 = vld [vmem:[#allocation10 + $0x88] sm:$0xff]
        %v734 = vld [vmem:[#allocation10 + $0x90] sm:$0xff]
        %v735 = vld [vmem:[#allocation10 + $0x98] sm:$0xff]
        %v736 = vld [vmem:[#allocation10 + $0xa0] sm:$0xff]
        %v737 = vld [vmem:[#allocation10 + $0xa8] sm:$0xff]
        %v738 = vld [vmem:[#allocation10 + $0xb0] sm:$0xff]
        %v739 = vld [vmem:[#allocation10 + $0xb8] sm:$0xff]
        %v740 = vld [vmem:[#allocation10 + $0xc0] sm:$0xff]
        %v741 = vld [vmem:[#allocation10 + $0xc8] sm:$0xff]
        %v742 = vld [vmem:[#allocation10 + $0xd0] sm:$0xff]
        %v743 = vld [vmem:[#allocation10 + $0xd8] sm:$0xff]
        %v744 = vld [vmem:[#allocation10 + $0xe0] sm:$0xff]
        %v745 = vld [vmem:[#allocation10 + $0xe8] sm:$0xff]
        %v746 = vld [vmem:[#allocation10 + $0xf0] sm:$0xff]
        %v747 = vld [vmem:[#allocation10 + $0xf8] sm:$0xff]
        %v748 = vld [vmem:[#allocation10 + $0x100] sm:$0xff]
        %v749 = vld [vmem:[#allocation10 + $0x108] sm:$0xff]
        %v750 = vld [vmem:[#allocation10 + $0x110] sm:$0xff]
        %v751 = vld [vmem:[#allocation10 + $0x118] sm:$0xff]
        %v752 = vld [vmem:[#allocation10 + $0x120] sm:$0xff]
        %v753 = vld [vmem:[#allocation10 + $0x128] sm:$0xff]
        %v754 = vld [vmem:[#allocation10 + $0x130] sm:$0xff]
        %v755 = vld [vmem:[#allocation10 + $0x138] sm:$0xff]
        %v756 = vld [vmem:[#allocation10 + $0x140] sm:$0xff]
        %v757 = vld [vmem:[#allocation10 + $0x148] sm:$0xff]
        %v758 = vld [vmem:[#allocation10 + $0x150] sm:$0xff]
        %v759 = vld [vmem:[#allocation10 + $0x158] sm:$0xff]
        %v760 = vld [vmem:[#allocation10 + $0x160] sm:$0xff]
        %v761 = vld [vmem:[#allocation10 + $0x168] sm:$0xff]
        %v762 = vld [vmem:[#allocation10 + $0x170] sm:$0xff]
        %v763 = vld [vmem:[#allocation10 + $0x178] sm:$0xff]
        %v764 = vld [vmem:[#allocation10 + $0x180] sm:$0xff]
        %v765 = vld [vmem:[#allocation10 + $0x188] sm:$0xff]
        %v766 = vld [vmem:[#allocation10 + $0x190] sm:$0xff]
        %v767 = vld [vmem:[#allocation10 + $0x198] sm:$0xff]
        %v768 = vld [vmem:[#allocation10 + $0x1a0] sm:$0xff]
        %v769 = vld [vmem:[#allocation10 + $0x1a8] sm:$0xff]
        %v770 = vld [vmem:[#allocation10 + $0x1b0] sm:$0xff]
        %v771 = vld [vmem:[#allocation10 + $0x1b8] sm:$0xff]
        %v772 = vld [vmem:[#allocation10 + $0x1c0] sm:$0xff]
        %v773 = vld [vmem:[#allocation10 + $0x1c8] sm:$0xff]
        %v774 = vld [vmem:[#allocation10 + $0x1d0] sm:$0xff]
        %v775 = vld [vmem:[#allocation10 + $0x1d8] sm:$0xff]
        %v776 = vld [vmem:[#allocation10 + $0x1e0] sm:$0xff]
        %v777 = vld [vmem:[#allocation10 + $0x1e8] sm:$0xff]
        %v778 = vld [vmem:[#allocation10 + $0x1f0] sm:$0xff]
        %v779 = vld [vmem:[#allocation10 + $0x1f8] sm:$0xff]
        %v781 = vperm.slane %v527, 0
        %v782 = vperm.slane %v527, 1
        %785 = vmatpush.msra.mxu0 %v746
        %786 = vmatpush.msra.mxu0 %v744
        %787 = vmatpush.msra.mxu0 %v742
        %788 = vmatpush.msra.mxu0 %v740
        %789 = vmatpush.msra.mxu0 %v738
        %790 = vmatpush.msra.mxu0 %v736
        %791 = vmatpush.msra.mxu0 %v734
        %792 = vmatpush.msra.mxu0 %v732
        %793 = vmatpush.msra.mxu0 %v730
        %794 = vmatpush.msra.mxu0 %v728
        %795 = vmatpush.msra.mxu0 %v726
        %796 = vmatpush.msra.mxu0 %v724
        %797 = vmatpush.msra.mxu0 %v722
        %798 = vmatpush.msra.mxu0 %v720
        %799 = vmatpush.msra.mxu0 %v718
        %800 = vmatpush.msra.mxu0 %v716
        %801 = vmatmul.f32.gmra.mxu0 %v528
        %v802 = vpop.f32.mrf.mxu0
        %v803 = vadd.f32 %v781, %v802
        %804 = vdwg.mxu0
        %805 = vmatpush.msra.mxu0 %v778
        %806 = vmatpush.msra.mxu0 %v776
        %807 = vmatpush.msra.mxu0 %v774
        %808 = vmatpush.msra.mxu0 %v772
        %809 = vmatpush.msra.mxu0 %v770
        %810 = vmatpush.msra.mxu0 %v768
        %811 = vmatpush.msra.mxu0 %v766
        %812 = vmatpush.msra.mxu0 %v764
        %813 = vmatpush.msra.mxu0 %v762
        %814 = vmatpush.msra.mxu0 %v760
        %815 = vmatpush.msra.mxu0 %v758
        %816 = vmatpush.msra.mxu0 %v756
        %817 = vmatpush.msra.mxu0 %v754
        %818 = vmatpush.msra.mxu0 %v752
        %819 = vmatpush.msra.mxu0 %v750
        %820 = vmatpush.msra.mxu0 %v748
        %821 = vmatmul.f32.gmra.mxu0 %v524
        %v822 = vpop.f32.mrf.mxu0
        %v823 = vadd.f32 %v803, %v822
        %824 = vdwg.mxu0
        %825 = vmatpush.msra.mxu0 %v747
        %826 = vmatpush.msra.mxu0 %v745
        %827 = vmatpush.msra.mxu0 %v743
        %828 = vmatpush.msra.mxu0 %v741
        %829 = vmatpush.msra.mxu0 %v739
        %830 = vmatpush.msra.mxu0 %v737
        %831 = vmatpush.msra.mxu0 %v735
        %832 = vmatpush.msra.mxu0 %v733
        %833 = vmatpush.msra.mxu0 %v731
        %834 = vmatpush.msra.mxu0 %v729
        %835 = vmatpush.msra.mxu0 %v727
        %836 = vmatpush.msra.mxu0 %v725
        %837 = vmatpush.msra.mxu0 %v723
        %838 = vmatpush.msra.mxu0 %v721
        %839 = vmatpush.msra.mxu0 %v719
        %840 = vmatpush.msra.mxu0 %v717
        %841 = vmatmul.f32.gmra.mxu0 %v528
        %v842 = vpop.f32.mrf.mxu0
        %v843 = vadd.f32 %v782, %v842
        %844 = vdwg.mxu0
        %845 = vmatpush.msra.mxu0 %v779
        %846 = vmatpush.msra.mxu0 %v777
        %847 = vmatpush.msra.mxu0 %v775
        %848 = vmatpush.msra.mxu0 %v773
        %849 = vmatpush.msra.mxu0 %v771
        %850 = vmatpush.msra.mxu0 %v769
        %851 = vmatpush.msra.mxu0 %v767
        %852 = vmatpush.msra.mxu0 %v765
        %853 = vmatpush.msra.mxu0 %v763
        %854 = vmatpush.msra.mxu0 %v761
        %855 = vmatpush.msra.mxu0 %v759
        %856 = vmatpush.msra.mxu0 %v757
        %857 = vmatpush.msra.mxu0 %v755
        %858 = vmatpush.msra.mxu0 %v753
        %859 = vmatpush.msra.mxu0 %v751
        %860 = vmatpush.msra.mxu0 %v749
        %861 = vmatmul.f32.gmra.mxu0 %v524
        %v862 = vpop.f32.mrf.mxu0
        %v863 = vadd.f32 %v843, %v862
        %864 = vdwg.mxu0
        %v865 = vmul.f32 %v696, %v863
        %v866 = vadd.f32 %v823, %v865
        %v867 = vtanh.pop %v866
        %v868 = vsub.f32 1.0, %v715
        %v869 = vmul.f32 %v868, %v867
        %v870 = vmul.f32 %v715, %v524
        %v871 = vadd.f32 %v869, %v870
        %872 = vst [vmem:[#allocation2] sm:$0xff] %v871
        %v873 = vld [vmem:[#allocation11] sm:$0xff]
        %v874 = vld [vmem:[#allocation11 + $0x8] sm:$0xff]
        %v875 = vld [vmem:[#allocation11 + $0x10] sm:$0xff]
        %v876 = vld [vmem:[#allocation11 + $0x18] sm:$0xff]
        %v877 = vld [vmem:[#allocation11 + $0x20] sm:$0xff]
        %v878 = vld [vmem:[#allocation11 + $0x28] sm:$0xff]
        %v879 = vld [vmem:[#allocation11 + $0x30] sm:$0xff]
        %v880 = vld [vmem:[#allocation11 + $0x38] sm:$0xff]
        %v881 = vld [vmem:[#allocation11 + $0x40] sm:$0xff]
        %v882 = vld [vmem:[#allocation11 + $0x48] sm:$0xff]
        %v883 = vld [vmem:[#allocation11 + $0x50] sm:$0xff]
        %v884 = vld [vmem:[#allocation11 + $0x58] sm:$0xff]
        %v885 = vld [vmem:[#allocation11 + $0x60] sm:$0xff]
        %v886 = vld [vmem:[#allocation11 + $0x68] sm:$0xff]
        %v887 = vld [vmem:[#allocation11 + $0x70] sm:$0xff]
        %v888 = vld [vmem:[#allocation11 + $0x78] sm:$0xff]
        %v889 = vld [vmem:[#allocation11 + $0x80] sm:$0xff]
        %v890 = vld [vmem:[#allocation11 + $0x88] sm:$0xff]
        %v891 = vld [vmem:[#allocation11 + $0x90] sm:$0xff]
        %v892 = vld [vmem:[#allocation11 + $0x98] sm:$0xff]
        %v893 = vld [vmem:[#allocation11 + $0xa0] sm:$0xff]
        %v894 = vld [vmem:[#allocation11 + $0xa8] sm:$0xff]
        %v895 = vld [vmem:[#allocation11 + $0xb0] sm:$0xff]
        %v896 = vld [vmem:[#allocation11 + $0xb8] sm:$0xff]
        %v897 = vld [vmem:[#allocation11 + $0xc0] sm:$0xff]
        %v898 = vld [vmem:[#allocation11 + $0xc8] sm:$0xff]
        %v899 = vld [vmem:[#allocation11 + $0xd0] sm:$0xff]
        %v900 = vld [vmem:[#allocation11 + $0xd8] sm:$0xff]
        %v901 = vld [vmem:[#allocation11 + $0xe0] sm:$0xff]
        %v902 = vld [vmem:[#allocation11 + $0xe8] sm:$0xff]
        %v903 = vld [vmem:[#allocation11 + $0xf0] sm:$0xff]
        %v904 = vld [vmem:[#allocation11 + $0xf8] sm:$0xff]
        %v905 = vld [vmem:[%s7] sm:$0x3]
        %v907 = vperm.slane %v905, 0
        %v908 = vperm.slane %v905, 1
        %911 = vmatpush.msra.mxu0 %v903
        %912 = vmatpush.msra.mxu0 %v901
        %913 = vmatpush.msra.mxu0 %v899
        %914 = vmatpush.msra.mxu0 %v897
        %915 = vmatpush.msra.mxu0 %v895
        %916 = vmatpush.msra.mxu0 %v893
        %917 = vmatpush.msra.mxu0 %v891
        %918 = vmatpush.msra.mxu0 %v889
        %919 = vmatpush.msra.mxu0 %v887
        %920 = vmatpush.msra.mxu0 %v885
        %921 = vmatpush.msra.mxu0 %v883
        %922 = vmatpush.msra.mxu0 %v881
        %923 = vmatpush.msra.mxu0 %v879
        %924 = vmatpush.msra.mxu0 %v877
        %925 = vmatpush.msra.mxu0 %v875
        %926 = vmatpush.msra.mxu0 %v873
        %927 = vmatmul.f32.gmra.mxu0 %v871
        %v928 = vpop.f32.mrf.mxu0
        %v929 = vadd.f32 %v907, %v928
        %930 = vdwg.mxu0
        %931 = vmatpush.msra.mxu0 %v904
        %932 = vmatpush.msra.mxu0 %v902
        %933 = vmatpush.msra.mxu0 %v900
        %934 = vmatpush.msra.mxu0 %v898
        %935 = vmatpush.msra.mxu0 %v896
        %936 = vmatpush.msra.mxu0 %v894
        %937 = vmatpush.msra.mxu0 %v892
        %938 = vmatpush.msra.mxu0 %v890
        %939 = vmatpush.msra.mxu0 %v888
        %940 = vmatpush.msra.mxu0 %v886
        %941 = vmatpush.msra.mxu0 %v884
        %942 = vmatpush.msra.mxu0 %v882
        %943 = vmatpush.msra.mxu0 %v880
        %944 = vmatpush.msra.mxu0 %v878
        %945 = vmatpush.msra.mxu0 %v876
        %946 = vmatpush.msra.mxu0 %v874
        %947 = vmatmul.f32.gmra.mxu0 %v871
        %v948 = vpop.f32.mrf.mxu0
        %v949 = vadd.f32 %v908, %v948
        %950 = vdwg.mxu0
        %v951 = vmax.f32 %v929, %v949
        %952 = vmax.xlane.f32.xlu0 %v951
        %v953 = vpop.xlane.xlu0 %952
        %v954 = vsub.f32 %v929, %v953
        %v955 = vsub.f32 %v949, %v953
        %v956 = vmul.f32 %v954, 1.442695
        %v957 = vpow.pop %v956
        %v958 = vmul.f32 %v955, 1.442695
        %v959 = vpow.pop %v958
        %v960 = vadd.f32 %v957, %v959
        %961 = vadd.xlane.f32.xlu0 %v960
        %v962 = vpop.xlane.xlu0 %961
        %v963 = vlog2.pop %v962
        %v964 = vmul.f32 %v963, 0.6931472
        %v965 = vadd.f32 %v964, %v953
        %v966 = vsub.f32 %v929, %v965
        %v967 = vsub.f32 %v949, %v965
        %968 = vst [vmem:[%s388] sm:$0xff] %v966
        %969 = vst [vmem:[%s388 + $0x8] sm:$0xff] %v967
        %p970 = scmp.eq.s32.totalorder %s41, 5
        // Predicated region
        $region69: #{decoder_rnn_decode.1} parent=47 // pred_check
          %p971 = pneg %p970
        $region70: #{decoder_rnn_decode.1} parent=47 // pred_check_branch
          %973 = sbr.rel (%p971) target = $region72
        $region71: #{decoder_rnn_decode.1} parent=47 // pred_region
          %974 = vst [vmem:[#allocation14] sm:$0xff] %v871
        $region72: #{decoder_rnn_decode.1} parent=47 // pred_fallthru
          _
        %s975 = sand.u32 %s210, 1
        %s976 = scalar_lea.sflag [#allocation7], %s975
        %s977 = sand.u32 %s210, 1
        %s978 = smul.addr %s977, 16
        %s979 = scalar_lea.vmem [#allocation13], %s978
        // Predicated region
        $region73: #{decoder_rnn_decode.1} parent=47 // pred_check
          %p980 = pneg %p220
        $region74: #{decoder_rnn_decode.1} parent=47 // pred_check_branch
          %982 = sbr.rel (%p980) target = $region76
        $region75: #{decoder_rnn_decode.1} parent=47 // pred_region
          %984 = vsyncadd %s976, 0
          %s985 = smul.addr %s40, 2
          %s986 = smul.addr %s41, 2
          %s987 = sadd.s32 %s985, %s986
          %s988 = smul.addr %s987, 8
          %s989 = scalar_lea.hbm %s8, %s988
          %s991 = sshll.u32 %s979, 4
          %s992 = int_to_ptr.vmem [resolvable:$true] %s991
          %s993 = sshll.u32 %s989, 4
          %s994 = int_to_ptr.hbm [resolvable:$true] %s993
          %996 = dma.vmem_to_hbm [thread:$0]  %s992, 256, %s994, %s976
        $region76: #{decoder_rnn_decode.1} parent=47 // pred_fallthru
          _
        // Predicated region
        $region77: #{decoder_rnn_decode.1} parent=47 // pred_check
          %p997 = pneg %p246
        $region78: #{decoder_rnn_decode.1} parent=47 // pred_check_branch
          %999 = sbr.rel (%p997) target = $region80
        $region79: #{decoder_rnn_decode.1} parent=47 // pred_region
          %1001 = vsyncadd [#allocation15], 0
          %s1002 = smul.addr %s40, 8
          %s1003 = scalar_lea.hbm %s9, %s1002
          %s1005 = sshll.u32 [#allocation14], 4
          %s1006 = int_to_ptr.vmem [resolvable:$true] %s1005
          %s1007 = sshll.u32 %s1003, 4
          %s1008 = int_to_ptr.hbm [resolvable:$true] %s1007
          %1010 = dma.vmem_to_hbm [thread:$0]  %s1006, 128, %s1008, [#allocation15]
        $region80: #{decoder_rnn_decode.1} parent=47 // pred_fallthru
          _
        // Predicated region
        $region81: #{decoder_rnn_decode.1} parent=47 // pred_check
          %p1011 = pneg %p246
        $region82: #{decoder_rnn_decode.1} parent=47 // pred_check_branch
          %1013 = sbr.rel (%p1011) target = $region84
        $region83: #{decoder_rnn_decode.1} parent=47 // pred_region
          %1015 = dma.done [#allocation15], 128
        $region84: #{decoder_rnn_decode.1} parent=47 // pred_fallthru
          _
      $region48: #{decoder_rnn_decode.1} parent=5 // pred_fallthru
        _
      %p1016 = scmp.le.s32.totalorder 2, %s31
      // Predicated region
      $region85: #{decoder_rnn_decode.1} parent=5 // pred_check
        %p1017 = pneg %p1016
      $region86: #{decoder_rnn_decode.1} parent=5 // pred_check_branch
        %1019 = sbr.rel (%p1017) target = $region88
      $region87: #{decoder_rnn_decode.1} parent=5 // pred_region
        %s1020 = ssub.s32 %s31, 2
        // Predicated region
        $region89: #{decoder_rnn_decode.1} parent=87 // pred_check
          %p1021 = pneg %p226
        $region90: #{decoder_rnn_decode.1} parent=87 // pred_check_branch
          %1023 = sbr.rel (%p1021) target = $region92
        $region91: #{decoder_rnn_decode.1} parent=87 // pred_region
          %s1024 = sand.u32 %s211, 1
          %s1025 = scalar_lea.sflag [#allocation7], %s1024
          %s1026 = sand.u32 %s211, 1
          %s1027 = smul.addr %s1026, 16
          %s1028 = scalar_lea.vmem [#allocation13], %s1027
          %1030 = dma.done %s1025, 256
        $region92: #{decoder_rnn_decode.1} parent=87 // pred_fallthru
          _
      $region88: #{decoder_rnn_decode.1} parent=5 // pred_fallthru
        _
    $region6: #{decoder_rnn_decode.1} parent=1 // loop_footer
      %s35 = sadd.s32 1, %s31
    $region7: #{decoder_rnn_decode.1} parent=1 // loop_footer_branch
      %30 = sbr.rel target = $region3
    $region8: #{decoder_rnn_decode.1} parent=1 // loop_exit
      _
    %1031 = vsyncpa [#allocation6], 1
    %s1032 = scalar_lea.sflag [#allocation6], 1
    %1033 = vsyncpa %s1032, 1
    %1034 = vsyncpa [#allocation9], 1
    %1035 = vsyncpa [#allocation12], 1
    %1036 = vsyncpa [#allocation7], 1
    %s1037 = scalar_lea.sflag [#allocation7], 1
    %1038 = vsyncpa %s1037, 1
    %1039 = vsyncpa [#allocation15], 1

</llo_original>
